<compile_context>
chip_gen: v6e
topology: v6e:2x2x1
jax: 0.10.0
libtpu: 0.0.40
codegen_flags: <defaults>
</compile_context>

<pallas_src>
import math

import jax
import jax.numpy as jnp
import numpy as np
from jax.experimental import pallas as pl
from jax.experimental.pallas import tpu as pltpu


def make_attention_kernel(D, Hq, Hkv, Dh, W, n_rep):
    scale = 1.0 / math.sqrt(Dh)
    half = Dh // 2

    def kernel(sp_ref,
               x_ref, wq_ref, bq_ref, wk_ref, bk_ref, wv_ref, bv_ref,
               cos_ref, sin_ref, kT_ref, v_ref, wo_ref, bo_ref,
               out_ref, knew_ref, vnew_ref):
        f32 = jnp.float32
        sp = sp_ref[0]                                   # start_pos (scalar, SMEM)
        pos = jax.lax.rem(sp, W)                         # rolling-buffer write slot
        num_valid = jnp.minimum(sp + 1, W)               # filled slots in the buffer

        x = x_ref[0]                                     # (1, D)

        # --- QKV projections (MXU), f32 accumulation ---
        q = jnp.dot(x, wq_ref[...], preferred_element_type=f32) + bq_ref[...].astype(f32)
        k = jnp.dot(x, wk_ref[...], preferred_element_type=f32) + bk_ref[...].astype(f32)
        v = jnp.dot(x, wv_ref[...], preferred_element_type=f32) + bv_ref[...].astype(f32)

        cos = cos_ref[...].astype(f32)                   # (1, Dh//2)
        sin = sin_ref[...].astype(f32)

        def rope(m):                                     # batched rotate-half on (H, Dh), [re | im]
            re = m[:, :half]
            im = m[:, half:]
            return jnp.concatenate([re * cos - im * sin,
                                    re * sin + im * cos], axis=1)

        # Head-major (H, Dh) matrices (one sublane concat each, batched RoPE).
        q2 = rope(jnp.concatenate([q[:, h * Dh:(h + 1) * Dh] for h in range(Hq)], axis=0))
        k2 = rope(jnp.concatenate([k[:, h * Dh:(h + 1) * Dh] for h in range(Hkv)], axis=0))
        v2 = jnp.concatenate([v[:, h * Dh:(h + 1) * Dh] for h in range(Hkv)], axis=0)

        # Only the current token's K/V rows leave the kernel (cache itself is read-only here).
        knew_ref[0] = k2.astype(knew_ref.dtype)
        vnew_ref[0] = v2.astype(vnew_ref.dtype)

        # Masks, hoisted out of the per-group loop.
        t_idx = jax.lax.broadcasted_iota(jnp.int32, (1, W), 1)
        is_cur = t_idx == pos                            # the slot being overwritten this step
        valid = t_idx < num_valid
        neg_big = f32(-1e30)
        zero = f32(0.0)

        cache_dt = kT_ref.dtype
        q2c = q2.astype(cache_dt)                        # MXU input dtype = cache dtype

        head_rows = []
        for g in range(Hkv):                             # one KV group per iteration
            lo = g * n_rep
            q_c = q2c[lo:lo + n_rep, :]                  # (n_rep, Dh)
            q_f = q2[lo:lo + n_rep, :]                   # f32 copy for the fresh-token score
            k_new = k2[g:g + 1, :]                       # (1, Dh) fresh key, from registers
            v_new = v2[g:g + 1, :]                       # (1, Dh) fresh value

            kT_g = kT_ref[0, g]                          # (Dh, W)  Dh-major -> no transpose
            s = jnp.dot(q_c, kT_g, preferred_element_type=f32) * scale          # (n_rep, W)
            s_cur = jnp.sum(q_f * k_new, axis=-1, keepdims=True) * scale        # (n_rep, 1)

            s = jnp.where(is_cur, s_cur, s)              # splice fresh token's score in
            s = jnp.where(valid, s, neg_big)             # mask unwritten slots

            s_max = jnp.max(s, axis=-1, keepdims=True)
            p = jnp.exp(s - s_max)
            denom = jnp.sum(p, axis=-1, keepdims=True)
            p = p * pl.reciprocal(denom, approx=True)

            p_cur = jnp.sum(jnp.where(is_cur, p, zero), axis=-1, keepdims=True)  # (n_rep, 1)
            p_hist = jnp.where(is_cur, zero, p)

            v_g = v_ref[0, g]                            # (W, Dh)
            o_g = jnp.dot(p_hist.astype(v_g.dtype), v_g, preferred_element_type=f32)
            o_g = o_g + p_cur * v_new                    # fresh token's V from registers

            for r in range(n_rep):
                head_rows.append(o_g[r:r + 1, :])

        attn = jnp.concatenate(head_rows, axis=1)        # (1, Hq*Dh), head-major
        o = jnp.dot(attn.astype(wo_ref.dtype), wo_ref[...],
                    preferred_element_type=f32) + bo_ref[...].astype(f32)
        out_ref[0] = o.astype(out_ref.dtype)

    return kernel


def self_attention_pallas(x, start_pos, wq_p, bq_p, wk_p, bk_p, wv, bv, wo, bo,
                          cos, sin, cache_kT, cache_v, n_heads, n_kv_heads, head_dim):
    """Single-token decode step.

    x        : (B, 1, D)
    cache_kT : (B, Hkv, Dh, W)  rolling K cache, Dh-major, de-interleaved per head (post-RoPE)
    cache_v  : (B, Hkv, W, Dh)  rolling V cache
    Returns (out (B, 1, D), new_cache_kT, new_cache_v).
    """
    B, S, D = x.shape
    assert S == 1, "only seq_len == 1 supported (matches the torch module)"
    Hq, Hkv, Dh = n_heads, n_kv_heads, head_dim
    assert Hq % Hkv == 0
    W = cache_v.shape[2]
    n_rep = Hq // Hkv
    half = Dh // 2

    kernel = make_attention_kernel(D, Hq, Hkv, Dh, W, n_rep)

    grid_spec = pltpu.PrefetchScalarGridSpec(
        num_scalar_prefetch=1,
        grid=(B,),
        in_specs=[
            pl.BlockSpec((1, 1, D), lambda b, sp: (b, 0, 0)),             # x
            pl.BlockSpec((D, Hq * Dh), lambda b, sp: (0, 0)),             # wq (permuted)
            pl.BlockSpec((1, Hq * Dh), lambda b, sp: (0, 0)),             # bq (permuted)
            pl.BlockSpec((D, Hkv * Dh), lambda b, sp: (0, 0)),            # wk (permuted)
            pl.BlockSpec((1, Hkv * Dh), lambda b, sp: (0, 0)),            # bk (permuted)
            pl.BlockSpec((D, Hkv * Dh), lambda b, sp: (0, 0)),            # wv
            pl.BlockSpec((1, Hkv * Dh), lambda b, sp: (0, 0)),            # bv
            pl.BlockSpec((1, half), lambda b, sp: (0, 0)),                # cos
            pl.BlockSpec((1, half), lambda b, sp: (0, 0)),                # sin
            pl.BlockSpec((1, Hkv, Dh, W), lambda b, sp: (b, 0, 0, 0)),    # K cache (read-only)
            pl.BlockSpec((1, Hkv, W, Dh), lambda b, sp: (b, 0, 0, 0)),    # V cache (read-only)
            pl.BlockSpec((Hq * Dh, D), lambda b, sp: (0, 0)),             # wo
            pl.BlockSpec((1, D), lambda b, sp: (0, 0)),                   # bo
        ],
        out_specs=[
            pl.BlockSpec((1, 1, D), lambda b, sp: (b, 0, 0)),             # attention output
            pl.BlockSpec((1, Hkv, Dh), lambda b, sp: (b, 0, 0)),          # new K rows (rotated)
            pl.BlockSpec((1, Hkv, Dh), lambda b, sp: (b, 0, 0)),          # new V rows
        ],
    )

    w_item = jnp.dtype(wq_p.dtype).itemsize
    c_item = jnp.dtype(cache_kT.dtype).itemsize
    x_item = jnp.dtype(x.dtype).itemsize
    flops = int(2 * B * D * (Hq + 2 * Hkv) * Dh          # QKV projections
                + 4 * B * Hq * Dh * W                    # scores + P@V
                + 2 * B * Hq * Dh * D)                   # output projection
    bytes_accessed = int(
        (D * (Hq + 2 * Hkv) * Dh + Hq * Dh * D + (Hq + 2 * Hkv) * Dh + D) * w_item
        + 2 * B * Hkv * W * Dh * c_item                  # K + V cache read
        + 2 * B * D * x_item                             # x in, out
        + 2 * B * Hkv * Dh * c_item)                     # new K/V rows out
    cost = pl.CostEstimate(flops=flops,
                           transcendentals=int(B * Hq * W),
                           bytes_accessed=bytes_accessed)

    out, k_rows, v_rows = pl.pallas_call(
        kernel,
        grid_spec=grid_spec,
        out_shape=(
            jax.ShapeDtypeStruct((B, 1, D), x.dtype),
            jax.ShapeDtypeStruct((B, Hkv, Dh), cache_kT.dtype),
            jax.ShapeDtypeStruct((B, Hkv, Dh), cache_v.dtype),
        ),
        compiler_params=pltpu.CompilerParams(
            dimension_semantics=("parallel",),
            vmem_limit_bytes=32 * 1024 * 1024,
        ),
        cost_estimate=cost,
    )(jnp.reshape(jnp.asarray(start_pos, jnp.int32), (1,)),
      x, wq_p, bq_p, wk_p, bk_p, wv, bv, cos, sin, cache_kT, cache_v, wo, bo)

    # Scatter the single updated rolling-buffer slot.  (In a real model, donate the cache buffers
    # under jit so this update happens in place — the kernel itself only emits the new rows.)
    pos = start_pos % W
    new_kT = jax.lax.dynamic_update_slice(cache_kT, k_rows[:, :, :, None], (0, 0, 0, pos))
    new_v = jax.lax.dynamic_update_slice(cache_v, v_rows[:, :, None, :], (0, 0, pos, 0))
    return out, new_kT, new_v


# ---------- pure-JAX reference reproducing the torch module semantics exactly ----------
def rope_interleaved(t, cos, sin):
    """Interleaved-pair RoPE (matches torch.view_as_complex).  cos/sin: (1, Dh//2)."""
    shp = t.shape
    tr = t.reshape(shp[:-1] + (shp[-1] // 2, 2))
    t0, t1 = tr[..., 0], tr[..., 1]
    o0 = t0 * cos - t1 * sin
    o1 = t0 * sin + t1 * cos
    return jnp.stack([o0, o1], axis=-1).reshape(shp)


def reference_forward(x, start_pos, wq, bq, wk, bk, wv, bv, wo, bo, cos, sin,
                      cache_k, cache_v, n_heads, n_kv_heads, head_dim):
    B, S, D = x.shape
    Hq, Hkv, Dh = n_heads, n_kv_heads, head_dim
    W = cache_k.shape[1]
    n_rep = Hq // Hkv

    xq = (x @ wq + bq).reshape(B, S, Hq, Dh)
    xk = (x @ wk + bk).reshape(B, S, Hkv, Dh)
    xv = (x @ wv + bv).reshape(B, S, Hkv, Dh)

    xq = rope_interleaved(xq, cos, sin)
    xk = rope_interleaved(xk, cos, sin)

    pos = start_pos % W
    cache_k = cache_k.at[:, pos:pos + 1].set(xk)
    cache_v = cache_v.at[:, pos:pos + 1].set(xv)

    sp1 = start_pos + 1
    eff = sp1 % W
    keys = jnp.concatenate([cache_k[:, eff:], cache_k[:, :eff]], axis=1)
    vals = jnp.concatenate([cache_v[:, eff:], cache_v[:, :eff]], axis=1)
    T = min(sp1, W)
    keys, vals = keys[:, -T:], vals[:, -T:]
    if n_rep > 1:
        keys = jnp.repeat(keys, n_rep, axis=2)
        vals = jnp.repeat(vals, n_rep, axis=2)

    q = xq.transpose(0, 2, 1, 3)
    k = keys.transpose(0, 2, 1, 3)
    v = vals.transpose(0, 2, 1, 3)
    scores = jnp.einsum('bhqd,bhkd->bhqk', q, k) / math.sqrt(Dh)
    scores = jax.nn.softmax(scores, axis=-1)
    out = jnp.einsum('bhqk,bhkd->bhqd', scores, v)
    out = out.transpose(0, 2, 1, 3).reshape(B, S, Hq * Dh)
    return out @ wo + bo


if __name__ == "__main__":
    # ModelArgs-consistent small shapes (dim=128, head_dim=32, n_heads=8, n_kv_heads=4 -> n_rep=2)
    B, D = 2, 128
    Hq, Hkv, Dh = 8, 4, 32
    W = 16                      # attn_window (rolling buffer length)
    theta = 10000.0
    half = Dh // 2

    key = jax.random.PRNGKey(0)
    ks = jax.random.split(key, 13)
    x = jax.random.normal(ks[0], (B, 1, D), jnp.float32)

    wq = jax.random.normal(ks[1], (D, Hq * Dh), jnp.float32) * 0.1
    bq = jax.random.normal(ks[2], (1, Hq * Dh), jnp.float32) * 0.1
    wk = jax.random.normal(ks[3], (D, Hkv * Dh), jnp.float32) * 0.1
    bk = jax.random.normal(ks[4], (1, Hkv * Dh), jnp.float32) * 0.1
    wv = jax.random.normal(ks[5], (D, Hkv * Dh), jnp.float32) * 0.1
    bv = jax.random.normal(ks[6], (1, Hkv * Dh), jnp.float32) * 0.1
    wo = jax.random.normal(ks[7], (Hq * Dh, D), jnp.float32) * 0.1
    bo = jax.random.normal(ks[8], (1, D), jnp.float32) * 0.1

    # per-head de-interleave permutation for the kernel's rotate-half RoPE
    perm = jnp.concatenate([jnp.arange(0, Dh, 2), jnp.arange(1, Dh, 2)])

    def permute_cols(w):
        return w.reshape(w.shape[0], -1, Dh)[:, :, perm].reshape(w.shape[0], -1)

    def permute_bias(b):
        return b.reshape(1, -1, Dh)[:, :, perm].reshape(1, -1)

    wq_p, bq_p = permute_cols(wq), permute_bias(bq)
    wk_p, bk_p = permute_cols(wk), permute_bias(bk)

    inv_freq = 1.0 / (theta ** (jnp.arange(0, Dh, 2, dtype=jnp.float32) / Dh))

    def rotary(pos_id):
        ang = pos_id * inv_freq
        return jnp.cos(ang)[None, :], jnp.sin(ang)[None, :]

    def to_kernel_layout(ck, cv):
        # torch layout (B, W, Hkv, Dh) -> K: (B, Hkv, Dh, W) de-interleaved, V: (B, Hkv, W, Dh)
        ckT = ck[..., perm].transpose(0, 2, 3, 1)
        cvk = cv.transpose(0, 2, 1, 3)
        return ckT, cvk

    def run_case(start_pos, ck, cv):
        cos, sin = rotary(start_pos)
        ckT, cvk = to_kernel_layout(ck, cv)

        out, new_kT, new_v = self_attention_pallas(
            x, start_pos, wq_p, bq_p, wk_p, bk_p, wv, bv, wo, bo,
            cos, sin, ckT, cvk, Hq, Hkv, Dh)
        out = jax.block_until_ready(out)

        ref = reference_forward(x, start_pos, wq, bq, wk, bk, wv, bv, wo, bo,
                                cos, sin, ck, cv, Hq, Hkv, Dh)
        np.testing.assert_allclose(np.asarray(out), np.asarray(ref), rtol=5e-2, atol=5e-2)

        # cache semantics: only the rolling slot changed, and it holds the fresh (rotated) K and V
        pos = start_pos % W
        xk = rope_interleaved((x @ wk + bk).reshape(B, 1, Hkv, Dh), cos, sin)[:, 0]
        xv = (x @ wv + bv).reshape(B, 1, Hkv, Dh)[:, 0]
        np.testing.assert_allclose(np.asarray(new_kT[:, :, :, pos]),
                                   np.asarray(xk[..., perm]), rtol=2e-2, atol=2e-2)
        np.testing.assert_allclose(np.asarray(new_v[:, :, pos, :]),
                                   np.asarray(xv), rtol=2e-2, atol=2e-2)
        keep = np.arange(W) != pos
        np.testing.assert_array_equal(np.asarray(new_kT)[..., keep], np.asarray(ckT)[..., keep])
        np.testing.assert_array_equal(np.asarray(new_v)[:, :, keep, :],
                                      np.asarray(cvk)[:, :, keep, :])

    # case 1: partially filled buffer (start_pos < attn_window)
    sp1 = 5
    k_hist = jax.random.normal(ks[9], (B, sp1, Hkv, Dh), jnp.float32)
    v_hist = jax.random.normal(ks[10], (B, sp1, Hkv, Dh), jnp.float32)
    ck1 = jnp.zeros((B, W, Hkv, Dh), jnp.float32).at[:, :sp1].set(k_hist)
    cv1 = jnp.zeros((B, W, Hkv, Dh), jnp.float32).at[:, :sp1].set(v_hist)
    run_case(sp1, ck1, cv1)

    # case 2: wrapped rolling buffer (start_pos > attn_window)
    sp2 = 20
    ck2 = jax.random.normal(ks[11], (B, W, Hkv, Dh), jnp.float32)
    cv2 = jax.random.normal(ks[12], (B, W, Hkv, Dh), jnp.float32)
    run_case(sp2, ck2, cv2)

    # case 3: bf16 weights / cache (f32 accumulation inside the kernel), loose smoke check
    bf16 = jnp.bfloat16
    cos, sin = rotary(sp1)
    ckT1, cvk1 = to_kernel_layout(ck1, cv1)
    out_bf16, _, _ = self_attention_pallas(
        x.astype(bf16), sp1,
        wq_p.astype(bf16), bq_p.astype(bf16), wk_p.astype(bf16), bk_p.astype(bf16),
        wv.astype(bf16), bv.astype(bf16), wo.astype(bf16), bo.astype(bf16),
        cos, sin, ckT1.astype(bf16), cvk1.astype(bf16), Hq, Hkv, Dh)
    out_bf16 = jax.block_until_ready(out_bf16)
    ref1 = reference_forward(x, sp1, wq, bq, wk, bk, wv, bv, wo, bo,
                             cos, sin, ck1, cv1, Hq, Hkv, Dh)
    np.testing.assert_allclose(np.asarray(out_bf16.astype(jnp.float32)), np.asarray(ref1),
                               rtol=2e-1, atol=2e-1)

    print("KERNEL_OK")
</pallas_src>

<mosaic_0001>
module attributes {stable_mosaic.version = 11 : i64} {
  func.func @kernel(%arg0: i32, %arg1: memref<1xi32, #tpu.memory_space<smem>>, %arg2: memref<1x1x128xf32, #tpu.memory_space<vmem>>, %arg3: memref<128x256xf32, #tpu.memory_space<vmem>>, %arg4: memref<1x256xf32, #tpu.memory_space<vmem>>, %arg5: memref<128x128xf32, #tpu.memory_space<vmem>>, %arg6: memref<1x128xf32, #tpu.memory_space<vmem>>, %arg7: memref<128x128xf32, #tpu.memory_space<vmem>>, %arg8: memref<1x128xf32, #tpu.memory_space<vmem>>, %arg9: memref<1x16xf32, #tpu.memory_space<vmem>>, %arg10: memref<1x16xf32, #tpu.memory_space<vmem>>, %arg11: memref<1x4x32x16xf32, #tpu.memory_space<vmem>>, %arg12: memref<1x4x16x32xf32, #tpu.memory_space<vmem>>, %arg13: memref<256x128xf32, #tpu.memory_space<vmem>>, %arg14: memref<1x128xf32, #tpu.memory_space<vmem>>, %arg15: memref<1x1x128xf32, #tpu.memory_space<vmem>>, %arg16: memref<1x4x32xf32, #tpu.memory_space<vmem>>, %arg17: memref<1x4x32xf32, #tpu.memory_space<vmem>>) attributes {dimension_semantics = [#tpu.dimension_semantics<parallel>], iteration_bounds = array<i64: 2>, scalar_prefetch = 1 : i64, scratch_operands = 0 : i64, tpu.core_type = #tpu.core_type<tc>, window_params = [{transform_indices = @transform_0, window_bounds = array<i64: 1, 1, 128>}, {pipeline_mode = #tpu.pipeline_mode<synchronous>, transform_indices = @transform_1, window_bounds = array<i64: 128, 256>}, {pipeline_mode = #tpu.pipeline_mode<synchronous>, transform_indices = @transform_2, window_bounds = array<i64: 1, 256>}, {pipeline_mode = #tpu.pipeline_mode<synchronous>, transform_indices = @transform_3, window_bounds = array<i64: 128, 128>}, {pipeline_mode = #tpu.pipeline_mode<synchronous>, transform_indices = @transform_4, window_bounds = array<i64: 1, 128>}, {pipeline_mode = #tpu.pipeline_mode<synchronous>, transform_indices = @transform_5, window_bounds = array<i64: 128, 128>}, {pipeline_mode = #tpu.pipeline_mode<synchronous>, transform_indices = @transform_6, window_bounds = array<i64: 1, 128>}, {pipeline_mode = #tpu.pipeline_mode<synchronous>, transform_indices = @transform_7, window_bounds = array<i64: 1, 16>}, {pipeline_mode = #tpu.pipeline_mode<synchronous>, transform_indices = @transform_8, window_bounds = array<i64: 1, 16>}, {transform_indices = @transform_9, window_bounds = array<i64: 1, 4, 32, 16>}, {transform_indices = @transform_10, window_bounds = array<i64: 1, 4, 16, 32>}, {pipeline_mode = #tpu.pipeline_mode<synchronous>, transform_indices = @transform_11, window_bounds = array<i64: 256, 128>}, {pipeline_mode = #tpu.pipeline_mode<synchronous>, transform_indices = @transform_12, window_bounds = array<i64: 1, 128>}, {transform_indices = @transform_13, window_bounds = array<i64: 1, 1, 128>}, {transform_indices = @transform_14, window_bounds = array<i64: 1, 4, 32>}, {transform_indices = @transform_15, window_bounds = array<i64: 1, 4, 32>}]} {
    %c0 = arith.constant 0 : index
    %0 = memref.load %arg1[%c0] : memref<1xi32, #tpu.memory_space<smem>>
    %c16_i32 = arith.constant 16 : i32
    %1 = arith.remsi %0, %c16_i32 : i32
    %c1_i32 = arith.constant 1 : i32
    %2 = arith.addi %0, %c1_i32 : i32
    %c16_i32_0 = arith.constant 16 : i32
    %3 = arith.minsi %2, %c16_i32_0 : i32
    %c0_1 = arith.constant 0 : index
    %c0_2 = arith.constant 0 : index
    %c0_3 = arith.constant 0 : index
    %4 = vector.load %arg2[%c0_1, %c0_2, %c0_3] : memref<1x1x128xf32, #tpu.memory_space<vmem>>, vector<1x1x128xf32>
    %5 = vector.shape_cast %4 : vector<1x1x128xf32> to vector<1x128xf32>
    %c0_4 = arith.constant 0 : index
    %c0_5 = arith.constant 0 : index
    %6 = vector.load %arg3[%c0_4, %c0_5] : memref<128x256xf32, #tpu.memory_space<vmem>>, vector<128x256xf32>
    %cst = arith.constant dense<0.000000e+00> : vector<1x256xf32>
    %7 = tpu.matmul %5, %6, %cst {dimension_numbers = #tpu.dot_dimension_numbers<[1], [0], [0], [1], [0, 0, 1, 1], [], []>} : vector<1x128xf32>, vector<128x256xf32>, vector<1x256xf32> -> vector<1x256xf32>
    %c0_6 = arith.constant 0 : index
    %c0_7 = arith.constant 0 : index
    %8 = vector.load %arg4[%c0_6, %c0_7] : memref<1x256xf32, #tpu.memory_space<vmem>>, vector<1x256xf32>
    %9 = arith.addf %7, %8 : vector<1x256xf32>
    %c0_8 = arith.constant 0 : index
    %c0_9 = arith.constant 0 : index
    %10 = vector.load %arg5[%c0_8, %c0_9] : memref<128x128xf32, #tpu.memory_space<vmem>>, vector<128x128xf32>
    %cst_10 = arith.constant dense<0.000000e+00> : vector<1x128xf32>
    %11 = tpu.matmul %5, %10, %cst_10 {dimension_numbers = #tpu.dot_dimension_numbers<[1], [0], [0], [1], [0, 0, 1, 1], [], []>} : vector<1x128xf32>, vector<128x128xf32>, vector<1x128xf32> -> vector<1x128xf32>
    %c0_11 = arith.constant 0 : index
    %c0_12 = arith.constant 0 : index
    %12 = vector.load %arg6[%c0_11, %c0_12] : memref<1x128xf32, #tpu.memory_space<vmem>>, vector<1x128xf32>
    %13 = arith.addf %11, %12 : vector<1x128xf32>
    %c0_13 = arith.constant 0 : index
    %c0_14 = arith.constant 0 : index
    %14 = vector.load %arg7[%c0_13, %c0_14] : memref<128x128xf32, #tpu.memory_space<vmem>>, vector<128x128xf32>
    %cst_15 = arith.constant dense<0.000000e+00> : vector<1x128xf32>
    %15 = tpu.matmul %5, %14, %cst_15 {dimension_numbers = #tpu.dot_dimension_numbers<[1], [0], [0], [1], [0, 0, 1, 1], [], []>} : vector<1x128xf32>, vector<128x128xf32>, vector<1x128xf32> -> vector<1x128xf32>
    %c0_16 = arith.constant 0 : index
    %c0_17 = arith.constant 0 : index
    %16 = vector.load %arg8[%c0_16, %c0_17] : memref<1x128xf32, #tpu.memory_space<vmem>>, vector<1x128xf32>
    %17 = arith.addf %15, %16 : vector<1x128xf32>
    %c0_18 = arith.constant 0 : index
    %c0_19 = arith.constant 0 : index
    %18 = vector.load %arg9[%c0_18, %c0_19] : memref<1x16xf32, #tpu.memory_space<vmem>>, vector<1x16xf32>
    %c0_20 = arith.constant 0 : index
    %c0_21 = arith.constant 0 : index
    %19 = vector.load %arg10[%c0_20, %c0_21] : memref<1x16xf32, #tpu.memory_space<vmem>>, vector<1x16xf32>
    %20 = vector.extract_strided_slice %9 {offsets = [0, 0], sizes = [1, 32], strides = [1, 1]} : vector<1x256xf32> to vector<1x32xf32>
    %21 = vector.extract_strided_slice %9 {offsets = [0, 32], sizes = [1, 32], strides = [1, 1]} : vector<1x256xf32> to vector<1x32xf32>
    %22 = vector.extract_strided_slice %9 {offsets = [0, 64], sizes = [1, 32], strides = [1, 1]} : vector<1x256xf32> to vector<1x32xf32>
    %23 = vector.extract_strided_slice %9 {offsets = [0, 96], sizes = [1, 32], strides = [1, 1]} : vector<1x256xf32> to vector<1x32xf32>
    %24 = vector.extract_strided_slice %9 {offsets = [0, 128], sizes = [1, 32], strides = [1, 1]} : vector<1x256xf32> to vector<1x32xf32>
    %25 = vector.extract_strided_slice %9 {offsets = [0, 160], sizes = [1, 32], strides = [1, 1]} : vector<1x256xf32> to vector<1x32xf32>
    %26 = vector.extract_strided_slice %9 {offsets = [0, 192], sizes = [1, 32], strides = [1, 1]} : vector<1x256xf32> to vector<1x32xf32>
    %27 = vector.extract_strided_slice %9 {offsets = [0, 224], sizes = [1, 32], strides = [1, 1]} : vector<1x256xf32> to vector<1x32xf32>
    %28 = tpu.concatenate %20, %21, %22, %23, %24, %25, %26, %27 in 0 : vector<1x32xf32>, vector<1x32xf32>, vector<1x32xf32>, vector<1x32xf32>, vector<1x32xf32>, vector<1x32xf32>, vector<1x32xf32>, vector<1x32xf32> -> vector<8x32xf32>
    %29 = vector.extract_strided_slice %28 {offsets = [0, 0], sizes = [8, 16], strides = [1, 1]} : vector<8x32xf32> to vector<8x16xf32>
    %30 = vector.extract_strided_slice %28 {offsets = [0, 16], sizes = [8, 16], strides = [1, 1]} : vector<8x32xf32> to vector<8x16xf32>
    %31 = vector.broadcast %18 : vector<1x16xf32> to vector<8x16xf32>
    %32 = arith.mulf %29, %31 : vector<8x16xf32>
    %33 = vector.broadcast %19 : vector<1x16xf32> to vector<8x16xf32>
    %34 = arith.mulf %30, %33 : vector<8x16xf32>
    %35 = arith.subf %32, %34 : vector<8x16xf32>
    %36 = vector.broadcast %19 : vector<1x16xf32> to vector<8x16xf32>
    %37 = arith.mulf %29, %36 : vector<8x16xf32>
    %38 = vector.broadcast %18 : vector<1x16xf32> to vector<8x16xf32>
    %39 = arith.mulf %30, %38 : vector<8x16xf32>
    %40 = arith.addf %37, %39 : vector<8x16xf32>
    %41 = tpu.concatenate %35, %40 in 1 : vector<8x16xf32>, vector<8x16xf32> -> vector<8x32xf32>
    %42 = vector.extract_strided_slice %13 {offsets = [0, 0], sizes = [1, 32], strides = [1, 1]} : vector<1x128xf32> to vector<1x32xf32>
    %43 = vector.extract_strided_slice %13 {offsets = [0, 32], sizes = [1, 32], strides = [1, 1]} : vector<1x128xf32> to vector<1x32xf32>
    %44 = vector.extract_strided_slice %13 {offsets = [0, 64], sizes = [1, 32], strides = [1, 1]} : vector<1x128xf32> to vector<1x32xf32>
    %45 = vector.extract_strided_slice %13 {offsets = [0, 96], sizes = [1, 32], strides = [1, 1]} : vector<1x128xf32> to vector<1x32xf32>
    %46 = tpu.concatenate %42, %43, %44, %45 in 0 : vector<1x32xf32>, vector<1x32xf32>, vector<1x32xf32>, vector<1x32xf32> -> vector<4x32xf32>
    %47 = vector.extract_strided_slice %46 {offsets = [0, 0], sizes = [4, 16], strides = [1, 1]} : vector<4x32xf32> to vector<4x16xf32>
    %48 = vector.extract_strided_slice %46 {offsets = [0, 16], sizes = [4, 16], strides = [1, 1]} : vector<4x32xf32> to vector<4x16xf32>
    %49 = vector.broadcast %18 : vector<1x16xf32> to vector<4x16xf32>
    %50 = arith.mulf %47, %49 : vector<4x16xf32>
    %51 = vector.broadcast %19 : vector<1x16xf32> to vector<4x16xf32>
    %52 = arith.mulf %48, %51 : vector<4x16xf32>
    %53 = arith.subf %50, %52 : vector<4x16xf32>
    %54 = vector.broadcast %19 : vector<1x16xf32> to vector<4x16xf32>
    %55 = arith.mulf %47, %54 : vector<4x16xf32>
    %56 = vector.broadcast %18 : vector<1x16xf32> to vector<4x16xf32>
    %57 = arith.mulf %48, %56 : vector<4x16xf32>
    %58 = arith.addf %55, %57 : vector<4x16xf32>
    %59 = tpu.concatenate %53, %58 in 1 : vector<4x16xf32>, vector<4x16xf32> -> vector<4x32xf32>
    %60 = vector.extract_strided_slice %17 {offsets = [0, 0], sizes = [1, 32], strides = [1, 1]} : vector<1x128xf32> to vector<1x32xf32>
    %61 = vector.extract_strided_slice %17 {offsets = [0, 32], sizes = [1, 32], strides = [1, 1]} : vector<1x128xf32> to vector<1x32xf32>
    %62 = vector.extract_strided_slice %17 {offsets = [0, 64], sizes = [1, 32], strides = [1, 1]} : vector<1x128xf32> to vector<1x32xf32>
    %63 = vector.extract_strided_slice %17 {offsets = [0, 96], sizes = [1, 32], strides = [1, 1]} : vector<1x128xf32> to vector<1x32xf32>
    %64 = tpu.concatenate %60, %61, %62, %63 in 0 : vector<1x32xf32>, vector<1x32xf32>, vector<1x32xf32>, vector<1x32xf32> -> vector<4x32xf32>
    %c0_22 = arith.constant 0 : index
    %c0_23 = arith.constant 0 : index
    %c0_24 = arith.constant 0 : index
    %65 = vector.load %arg16[%c0_22, %c0_23, %c0_24] : memref<1x4x32xf32, #tpu.memory_space<vmem>>, vector<1x4x32xf32>
    %66 = vector.shape_cast %65 : vector<1x4x32xf32> to vector<4x32xf32>
    %67 = vector.shape_cast %59 : vector<4x32xf32> to vector<1x4x32xf32>
    tpu.vector_store %arg16[%c0_22, %c0_23, %c0_24], %67 {strides = array<i32>} : memref<1x4x32xf32, #tpu.memory_space<vmem>>, vector<1x4x32xf32>,
    %c0_25 = arith.constant 0 : index
    %c0_26 = arith.constant 0 : index
    %c0_27 = arith.constant 0 : index
    %68 = vector.load %arg17[%c0_25, %c0_26, %c0_27] : memref<1x4x32xf32, #tpu.memory_space<vmem>>, vector<1x4x32xf32>
    %69 = vector.shape_cast %68 : vector<1x4x32xf32> to vector<4x32xf32>
    %70 = vector.shape_cast %64 : vector<4x32xf32> to vector<1x4x32xf32>
    tpu.vector_store %arg17[%c0_25, %c0_26, %c0_27], %70 {strides = array<i32>} : memref<1x4x32xf32, #tpu.memory_space<vmem>>, vector<1x4x32xf32>,
    %71 = tpu.iota {dimensions = array<i32: 1>} : vector<1x16xi32>
    %72 = vector.broadcast %1 : i32 to vector<1x16xi32>
    %73 = arith.cmpi eq, %71, %72 : vector<1x16xi32>
    %74 = vector.broadcast %3 : i32 to vector<1x16xi32>
    %75 = arith.cmpi slt, %71, %74 : vector<1x16xi32>
    %76 = vector.extract_strided_slice %41 {offsets = [0, 0], sizes = [2, 32], strides = [1, 1]} : vector<8x32xf32> to vector<2x32xf32>
    %77 = vector.extract_strided_slice %41 {offsets = [0, 0], sizes = [2, 32], strides = [1, 1]} : vector<8x32xf32> to vector<2x32xf32>
    %78 = vector.extract_strided_slice %59 {offsets = [0, 0], sizes = [1, 32], strides = [1, 1]} : vector<4x32xf32> to vector<1x32xf32>
    %79 = vector.extract_strided_slice %64 {offsets = [0, 0], sizes = [1, 32], strides = [1, 1]} : vector<4x32xf32> to vector<1x32xf32>
    %c0_28 = arith.constant 0 : index
    %c0_29 = arith.constant 0 : index
    %c0_30 = arith.constant 0 : index
    %c0_31 = arith.constant 0 : index
    %80 = vector.load %arg11[%c0_28, %c0_29, %c0_30, %c0_31] : memref<1x4x32x16xf32, #tpu.memory_space<vmem>>, vector<1x1x32x16xf32>
    %81 = vector.shape_cast %80 : vector<1x1x32x16xf32> to vector<32x16xf32>
    %cst_32 = arith.constant dense<0.000000e+00> : vector<2x16xf32>
    %82 = tpu.matmul %76, %81, %cst_32 {dimension_numbers = #tpu.dot_dimension_numbers<[1], [0], [0], [1], [0, 0, 1, 1], [], []>} : vector<2x32xf32>, vector<32x16xf32>, vector<2x16xf32> -> vector<2x16xf32>
    %cst_33 = arith.constant 0.176776692 : f32
    %83 = vector.broadcast %cst_33 : f32 to vector<2x16xf32>
    %84 = arith.mulf %82, %83 : vector<2x16xf32>
    %85 = vector.broadcast %78 : vector<1x32xf32> to vector<2x32xf32>
    %86 = arith.mulf %77, %85 : vector<2x32xf32>
    %cst_34 = arith.constant dense<0.000000e+00> : vector<2xf32>
    %87 = vector.multi_reduction <add>, %86, %cst_34 [1] : vector<2x32xf32> to vector<2xf32>
    %88 = vector.shape_cast %87 : vector<2xf32> to vector<2x1xf32>
    %cst_35 = arith.constant 0.176776692 : f32
    %89 = vector.broadcast %cst_35 : f32 to vector<2x1xf32>
    %90 = arith.mulf %88, %89 : vector<2x1xf32>
    %91 = vector.shape_cast %73 : vector<1x16xi1> to vector<1x16xi1>
    %92 = vector.broadcast %91 : vector<1x16xi1> to vector<2x16xi1>
    %93 = vector.shape_cast %90 : vector<2x1xf32> to vector<2x1xf32>
    %94 = vector.broadcast %93 : vector<2x1xf32> to vector<2x16xf32>
    %95 = arith.select %92, %94, %84 : vector<2x16xi1>, vector<2x16xf32>
    %cst_36 = arith.constant -1.000000e+30 : f32
    %96 = vector.shape_cast %75 : vector<1x16xi1> to vector<1x16xi1>
    %97 = vector.broadcast %96 : vector<1x16xi1> to vector<2x16xi1>
    %98 = vector.broadcast %cst_36 : f32 to vector<2x16xf32>
    %99 = arith.select %97, %95, %98 : vector<2x16xi1>, vector<2x16xf32>
    %cst_37 = arith.constant dense<0xFF800000> : vector<2xf32>
    %100 = vector.multi_reduction <maximumf>, %99, %cst_37 [1] : vector<2x16xf32> to vector<2xf32>
    %101 = vector.shape_cast %100 : vector<2xf32> to vector<2x1xf32>
    %102 = vector.broadcast %101 : vector<2x1xf32> to vector<2x16xf32>
    %103 = arith.subf %99, %102 : vector<2x16xf32>
    %104 = math.exp %103 : vector<2x16xf32>
    %cst_38 = arith.constant dense<0.000000e+00> : vector<2xf32>
    %105 = vector.multi_reduction <add>, %104, %cst_38 [1] : vector<2x16xf32> to vector<2xf32>
    %106 = vector.shape_cast %105 : vector<2xf32> to vector<2x1xf32>
    %107 = tpu.reciprocal %106 {approx = true} : vector<2x1xf32> -> vector<2x1xf32>
    %108 = vector.broadcast %107 : vector<2x1xf32> to vector<2x16xf32>
    %109 = arith.mulf %104, %108 : vector<2x16xf32>
    %cst_39 = arith.constant 0.000000e+00 : f32
    %110 = vector.shape_cast %73 : vector<1x16xi1> to vector<1x16xi1>
    %111 = vector.broadcast %110 : vector<1x16xi1> to vector<2x16xi1>
    %112 = vector.broadcast %cst_39 : f32 to vector<2x16xf32>
    %113 = arith.select %111, %109, %112 : vector<2x16xi1>, vector<2x16xf32>
    %cst_40 = arith.constant dense<0.000000e+00> : vector<2xf32>
    %114 = vector.multi_reduction <add>, %113, %cst_40 [1] : vector<2x16xf32> to vector<2xf32>
    %115 = vector.shape_cast %114 : vector<2xf32> to vector<2x1xf32>
    %cst_41 = arith.constant 0.000000e+00 : f32
    %116 = vector.shape_cast %73 : vector<1x16xi1> to vector<1x16xi1>
    %117 = vector.broadcast %116 : vector<1x16xi1> to vector<2x16xi1>
    %118 = vector.broadcast %cst_41 : f32 to vector<2x16xf32>
    %119 = arith.select %117, %118, %109 : vector<2x16xi1>, vector<2x16xf32>
    %c0_42 = arith.constant 0 : index
    %c0_43 = arith.constant 0 : index
    %c0_44 = arith.constant 0 : index
    %c0_45 = arith.constant 0 : index
    %120 = vector.load %arg12[%c0_42, %c0_43, %c0_44, %c0_45] : memref<1x4x16x32xf32, #tpu.memory_space<vmem>>, vector<1x1x16x32xf32>
    %121 = vector.shape_cast %120 : vector<1x1x16x32xf32> to vector<16x32xf32>
    %cst_46 = arith.constant dense<0.000000e+00> : vector<2x32xf32>
    %122 = tpu.matmul %119, %121, %cst_46 {dimension_numbers = #tpu.dot_dimension_numbers<[1], [0], [0], [1], [0, 0, 1, 1], [], []>} : vector<2x16xf32>, vector<16x32xf32>, vector<2x32xf32> -> vector<2x32xf32>
    %123 = vector.broadcast %115 : vector<2x1xf32> to vector<2x32xf32>
    %124 = vector.broadcast %79 : vector<1x32xf32> to vector<2x32xf32>
    %125 = arith.mulf %123, %124 : vector<2x32xf32>
    %126 = arith.addf %122, %125 : vector<2x32xf32>
    %127 = vector.extract_strided_slice %126 {offsets = [0, 0], sizes = [1, 32], strides = [1, 1]} : vector<2x32xf32> to vector<1x32xf32>
    %128 = vector.extract_strided_slice %126 {offsets = [1, 0], sizes = [1, 32], strides = [1, 1]} : vector<2x32xf32> to vector<1x32xf32>
    %129 = vector.extract_strided_slice %41 {offsets = [2, 0], sizes = [2, 32], strides = [1, 1]} : vector<8x32xf32> to vector<2x32xf32>
    %130 = vector.extract_strided_slice %41 {offsets = [2, 0], sizes = [2, 32], strides = [1, 1]} : vector<8x32xf32> to vector<2x32xf32>
    %131 = vector.extract_strided_slice %59 {offsets = [1, 0], sizes = [1, 32], strides = [1, 1]} : vector<4x32xf32> to vector<1x32xf32>
    %132 = vector.extract_strided_slice %64 {offsets = [1, 0], sizes = [1, 32], strides = [1, 1]} : vector<4x32xf32> to vector<1x32xf32>
    %c0_47 = arith.constant 0 : index
    %c1 = arith.constant 1 : index
    %c0_48 = arith.constant 0 : index
    %c0_49 = arith.constant 0 : index
    %133 = vector.load %arg11[%c0_47, %c1, %c0_48, %c0_49] : memref<1x4x32x16xf32, #tpu.memory_space<vmem>>, vector<1x1x32x16xf32>
    %134 = vector.shape_cast %133 : vector<1x1x32x16xf32> to vector<32x16xf32>
    %cst_50 = arith.constant dense<0.000000e+00> : vector<2x16xf32>
    %135 = tpu.matmul %129, %134, %cst_50 {dimension_numbers = #tpu.dot_dimension_numbers<[1], [0], [0], [1], [0, 0, 1, 1], [], []>} : vector<2x32xf32>, vector<32x16xf32>, vector<2x16xf32> -> vector<2x16xf32>
    %cst_51 = arith.constant 0.176776692 : f32
    %136 = vector.broadcast %cst_51 : f32 to vector<2x16xf32>
    %137 = arith.mulf %135, %136 : vector<2x16xf32>
    %138 = vector.broadcast %131 : vector<1x32xf32> to vector<2x32xf32>
    %139 = arith.mulf %130, %138 : vector<2x32xf32>
    %cst_52 = arith.constant dense<0.000000e+00> : vector<2xf32>
    %140 = vector.multi_reduction <add>, %139, %cst_52 [1] : vector<2x32xf32> to vector<2xf32>
    %141 = vector.shape_cast %140 : vector<2xf32> to vector<2x1xf32>
    %cst_53 = arith.constant 0.176776692 : f32
    %142 = vector.broadcast %cst_53 : f32 to vector<2x1xf32>
    %143 = arith.mulf %141, %142 : vector<2x1xf32>
    %144 = vector.shape_cast %73 : vector<1x16xi1> to vector<1x16xi1>
    %145 = vector.broadcast %144 : vector<1x16xi1> to vector<2x16xi1>
    %146 = vector.shape_cast %143 : vector<2x1xf32> to vector<2x1xf32>
    %147 = vector.broadcast %146 : vector<2x1xf32> to vector<2x16xf32>
    %148 = arith.select %145, %147, %137 : vector<2x16xi1>, vector<2x16xf32>
    %cst_54 = arith.constant -1.000000e+30 : f32
    %149 = vector.shape_cast %75 : vector<1x16xi1> to vector<1x16xi1>
    %150 = vector.broadcast %149 : vector<1x16xi1> to vector<2x16xi1>
    %151 = vector.broadcast %cst_54 : f32 to vector<2x16xf32>
    %152 = arith.select %150, %148, %151 : vector<2x16xi1>, vector<2x16xf32>
    %cst_55 = arith.constant dense<0xFF800000> : vector<2xf32>
    %153 = vector.multi_reduction <maximumf>, %152, %cst_55 [1] : vector<2x16xf32> to vector<2xf32>
    %154 = vector.shape_cast %153 : vector<2xf32> to vector<2x1xf32>
    %155 = vector.broadcast %154 : vector<2x1xf32> to vector<2x16xf32>
    %156 = arith.subf %152, %155 : vector<2x16xf32>
    %157 = math.exp %156 : vector<2x16xf32>
    %cst_56 = arith.constant dense<0.000000e+00> : vector<2xf32>
    %158 = vector.multi_reduction <add>, %157, %cst_56 [1] : vector<2x16xf32> to vector<2xf32>
    %159 = vector.shape_cast %158 : vector<2xf32> to vector<2x1xf32>
    %160 = tpu.reciprocal %159 {approx = true} : vector<2x1xf32> -> vector<2x1xf32>
    %161 = vector.broadcast %160 : vector<2x1xf32> to vector<2x16xf32>
    %162 = arith.mulf %157, %161 : vector<2x16xf32>
    %cst_57 = arith.constant 0.000000e+00 : f32
    %163 = vector.shape_cast %73 : vector<1x16xi1> to vector<1x16xi1>
    %164 = vector.broadcast %163 : vector<1x16xi1> to vector<2x16xi1>
    %165 = vector.broadcast %cst_57 : f32 to vector<2x16xf32>
    %166 = arith.select %164, %162, %165 : vector<2x16xi1>, vector<2x16xf32>
    %cst_58 = arith.constant dense<0.000000e+00> : vector<2xf32>
    %167 = vector.multi_reduction <add>, %166, %cst_58 [1] : vector<2x16xf32> to vector<2xf32>
    %168 = vector.shape_cast %167 : vector<2xf32> to vector<2x1xf32>
    %cst_59 = arith.constant 0.000000e+00 : f32
    %169 = vector.shape_cast %73 : vector<1x16xi1> to vector<1x16xi1>
    %170 = vector.broadcast %169 : vector<1x16xi1> to vector<2x16xi1>
    %171 = vector.broadcast %cst_59 : f32 to vector<2x16xf32>
    %172 = arith.select %170, %171, %162 : vector<2x16xi1>, vector<2x16xf32>
    %c0_60 = arith.constant 0 : index
    %c1_61 = arith.constant 1 : index
    %c0_62 = arith.constant 0 : index
    %c0_63 = arith.constant 0 : index
    %173 = vector.load %arg12[%c0_60, %c1_61, %c0_62, %c0_63] : memref<1x4x16x32xf32, #tpu.memory_space<vmem>>, vector<1x1x16x32xf32>
    %174 = vector.shape_cast %173 : vector<1x1x16x32xf32> to vector<16x32xf32>
    %cst_64 = arith.constant dense<0.000000e+00> : vector<2x32xf32>
    %175 = tpu.matmul %172, %174, %cst_64 {dimension_numbers = #tpu.dot_dimension_numbers<[1], [0], [0], [1], [0, 0, 1, 1], [], []>} : vector<2x16xf32>, vector<16x32xf32>, vector<2x32xf32> -> vector<2x32xf32>
    %176 = vector.broadcast %168 : vector<2x1xf32> to vector<2x32xf32>
    %177 = vector.broadcast %132 : vector<1x32xf32> to vector<2x32xf32>
    %178 = arith.mulf %176, %177 : vector<2x32xf32>
    %179 = arith.addf %175, %178 : vector<2x32xf32>
    %180 = vector.extract_strided_slice %179 {offsets = [0, 0], sizes = [1, 32], strides = [1, 1]} : vector<2x32xf32> to vector<1x32xf32>
    %181 = vector.extract_strided_slice %179 {offsets = [1, 0], sizes = [1, 32], strides = [1, 1]} : vector<2x32xf32> to vector<1x32xf32>
    %182 = vector.extract_strided_slice %41 {offsets = [4, 0], sizes = [2, 32], strides = [1, 1]} : vector<8x32xf32> to vector<2x32xf32>
    %183 = vector.extract_strided_slice %41 {offsets = [4, 0], sizes = [2, 32], strides = [1, 1]} : vector<8x32xf32> to vector<2x32xf32>
    %184 = vector.extract_strided_slice %59 {offsets = [2, 0], sizes = [1, 32], strides = [1, 1]} : vector<4x32xf32> to vector<1x32xf32>
    %185 = vector.extract_strided_slice %64 {offsets = [2, 0], sizes = [1, 32], strides = [1, 1]} : vector<4x32xf32> to vector<1x32xf32>
    %c0_65 = arith.constant 0 : index
    %c2 = arith.constant 2 : index
    %c0_66 = arith.constant 0 : index
    %c0_67 = arith.constant 0 : index
    %186 = vector.load %arg11[%c0_65, %c2, %c0_66, %c0_67] : memref<1x4x32x16xf32, #tpu.memory_space<vmem>>, vector<1x1x32x16xf32>
    %187 = vector.shape_cast %186 : vector<1x1x32x16xf32> to vector<32x16xf32>
    %cst_68 = arith.constant dense<0.000000e+00> : vector<2x16xf32>
    %188 = tpu.matmul %182, %187, %cst_68 {dimension_numbers = #tpu.dot_dimension_numbers<[1], [0], [0], [1], [0, 0, 1, 1], [], []>} : vector<2x32xf32>, vector<32x16xf32>, vector<2x16xf32> -> vector<2x16xf32>
    %cst_69 = arith.constant 0.176776692 : f32
    %189 = vector.broadcast %cst_69 : f32 to vector<2x16xf32>
    %190 = arith.mulf %188, %189 : vector<2x16xf32>
    %191 = vector.broadcast %184 : vector<1x32xf32> to vector<2x32xf32>
    %192 = arith.mulf %183, %191 : vector<2x32xf32>
    %cst_70 = arith.constant dense<0.000000e+00> : vector<2xf32>
    %193 = vector.multi_reduction <add>, %192, %cst_70 [1] : vector<2x32xf32> to vector<2xf32>
    %194 = vector.shape_cast %193 : vector<2xf32> to vector<2x1xf32>
    %cst_71 = arith.constant 0.176776692 : f32
    %195 = vector.broadcast %cst_71 : f32 to vector<2x1xf32>
    %196 = arith.mulf %194, %195 : vector<2x1xf32>
    %197 = vector.shape_cast %73 : vector<1x16xi1> to vector<1x16xi1>
    %198 = vector.broadcast %197 : vector<1x16xi1> to vector<2x16xi1>
    %199 = vector.shape_cast %196 : vector<2x1xf32> to vector<2x1xf32>
    %200 = vector.broadcast %199 : vector<2x1xf32> to vector<2x16xf32>
    %201 = arith.select %198, %200, %190 : vector<2x16xi1>, vector<2x16xf32>
    %cst_72 = arith.constant -1.000000e+30 : f32
    %202 = vector.shape_cast %75 : vector<1x16xi1> to vector<1x16xi1>
    %203 = vector.broadcast %202 : vector<1x16xi1> to vector<2x16xi1>
    %204 = vector.broadcast %cst_72 : f32 to vector<2x16xf32>
    %205 = arith.select %203, %201, %204 : vector<2x16xi1>, vector<2x16xf32>
    %cst_73 = arith.constant dense<0xFF800000> : vector<2xf32>
    %206 = vector.multi_reduction <maximumf>, %205, %cst_73 [1] : vector<2x16xf32> to vector<2xf32>
    %207 = vector.shape_cast %206 : vector<2xf32> to vector<2x1xf32>
    %208 = vector.broadcast %207 : vector<2x1xf32> to vector<2x16xf32>
    %209 = arith.subf %205, %208 : vector<2x16xf32>
    %210 = math.exp %209 : vector<2x16xf32>
    %cst_74 = arith.constant dense<0.000000e+00> : vector<2xf32>
    %211 = vector.multi_reduction <add>, %210, %cst_74 [1] : vector<2x16xf32> to vector<2xf32>
    %212 = vector.shape_cast %211 : vector<2xf32> to vector<2x1xf32>
    %213 = tpu.reciprocal %212 {approx = true} : vector<2x1xf32> -> vector<2x1xf32>
    %214 = vector.broadcast %213 : vector<2x1xf32> to vector<2x16xf32>
    %215 = arith.mulf %210, %214 : vector<2x16xf32>
    %cst_75 = arith.constant 0.000000e+00 : f32
    %216 = vector.shape_cast %73 : vector<1x16xi1> to vector<1x16xi1>
    %217 = vector.broadcast %216 : vector<1x16xi1> to vector<2x16xi1>
    %218 = vector.broadcast %cst_75 : f32 to vector<2x16xf32>
    %219 = arith.select %217, %215, %218 : vector<2x16xi1>, vector<2x16xf32>
    %cst_76 = arith.constant dense<0.000000e+00> : vector<2xf32>
    %220 = vector.multi_reduction <add>, %219, %cst_76 [1] : vector<2x16xf32> to vector<2xf32>
    %221 = vector.shape_cast %220 : vector<2xf32> to vector<2x1xf32>
    %cst_77 = arith.constant 0.000000e+00 : f32
    %222 = vector.shape_cast %73 : vector<1x16xi1> to vector<1x16xi1>
    %223 = vector.broadcast %222 : vector<1x16xi1> to vector<2x16xi1>
    %224 = vector.broadcast %cst_77 : f32 to vector<2x16xf32>
    %225 = arith.select %223, %224, %215 : vector<2x16xi1>, vector<2x16xf32>
    %c0_78 = arith.constant 0 : index
    %c2_79 = arith.constant 2 : index
    %c0_80 = arith.constant 0 : index
    %c0_81 = arith.constant 0 : index
    %226 = vector.load %arg12[%c0_78, %c2_79, %c0_80, %c0_81] : memref<1x4x16x32xf32, #tpu.memory_space<vmem>>, vector<1x1x16x32xf32>
    %227 = vector.shape_cast %226 : vector<1x1x16x32xf32> to vector<16x32xf32>
    %cst_82 = arith.constant dense<0.000000e+00> : vector<2x32xf32>
    %228 = tpu.matmul %225, %227, %cst_82 {dimension_numbers = #tpu.dot_dimension_numbers<[1], [0], [0], [1], [0, 0, 1, 1], [], []>} : vector<2x16xf32>, vector<16x32xf32>, vector<2x32xf32> -> vector<2x32xf32>
    %229 = vector.broadcast %221 : vector<2x1xf32> to vector<2x32xf32>
    %230 = vector.broadcast %185 : vector<1x32xf32> to vector<2x32xf32>
    %231 = arith.mulf %229, %230 : vector<2x32xf32>
    %232 = arith.addf %228, %231 : vector<2x32xf32>
    %233 = vector.extract_strided_slice %232 {offsets = [0, 0], sizes = [1, 32], strides = [1, 1]} : vector<2x32xf32> to vector<1x32xf32>
    %234 = vector.extract_strided_slice %232 {offsets = [1, 0], sizes = [1, 32], strides = [1, 1]} : vector<2x32xf32> to vector<1x32xf32>
    %235 = vector.extract_strided_slice %41 {offsets = [6, 0], sizes = [2, 32], strides = [1, 1]} : vector<8x32xf32> to vector<2x32xf32>
    %236 = vector.extract_strided_slice %41 {offsets = [6, 0], sizes = [2, 32], strides = [1, 1]} : vector<8x32xf32> to vector<2x32xf32>
    %237 = vector.extract_strided_slice %59 {offsets = [3, 0], sizes = [1, 32], strides = [1, 1]} : vector<4x32xf32> to vector<1x32xf32>
    %238 = vector.extract_strided_slice %64 {offsets = [3, 0], sizes = [1, 32], strides = [1, 1]} : vector<4x32xf32> to vector<1x32xf32>
    %c0_83 = arith.constant 0 : index
    %c3 = arith.constant 3 : index
    %c0_84 = arith.constant 0 : index
    %c0_85 = arith.constant 0 : index
    %239 = vector.load %arg11[%c0_83, %c3, %c0_84, %c0_85] : memref<1x4x32x16xf32, #tpu.memory_space<vmem>>, vector<1x1x32x16xf32>
    %240 = vector.shape_cast %239 : vector<1x1x32x16xf32> to vector<32x16xf32>
    %cst_86 = arith.constant dense<0.000000e+00> : vector<2x16xf32>
    %241 = tpu.matmul %235, %240, %cst_86 {dimension_numbers = #tpu.dot_dimension_numbers<[1], [0], [0], [1], [0, 0, 1, 1], [], []>} : vector<2x32xf32>, vector<32x16xf32>, vector<2x16xf32> -> vector<2x16xf32>
    %cst_87 = arith.constant 0.176776692 : f32
    %242 = vector.broadcast %cst_87 : f32 to vector<2x16xf32>
    %243 = arith.mulf %241, %242 : vector<2x16xf32>
    %244 = vector.broadcast %237 : vector<1x32xf32> to vector<2x32xf32>
    %245 = arith.mulf %236, %244 : vector<2x32xf32>
    %cst_88 = arith.constant dense<0.000000e+00> : vector<2xf32>
    %246 = vector.multi_reduction <add>, %245, %cst_88 [1] : vector<2x32xf32> to vector<2xf32>
    %247 = vector.shape_cast %246 : vector<2xf32> to vector<2x1xf32>
    %cst_89 = arith.constant 0.176776692 : f32
    %248 = vector.broadcast %cst_89 : f32 to vector<2x1xf32>
    %249 = arith.mulf %247, %248 : vector<2x1xf32>
    %250 = vector.shape_cast %73 : vector<1x16xi1> to vector<1x16xi1>
    %251 = vector.broadcast %250 : vector<1x16xi1> to vector<2x16xi1>
    %252 = vector.shape_cast %249 : vector<2x1xf32> to vector<2x1xf32>
    %253 = vector.broadcast %252 : vector<2x1xf32> to vector<2x16xf32>
    %254 = arith.select %251, %253, %243 : vector<2x16xi1>, vector<2x16xf32>
    %cst_90 = arith.constant -1.000000e+30 : f32
    %255 = vector.shape_cast %75 : vector<1x16xi1> to vector<1x16xi1>
    %256 = vector.broadcast %255 : vector<1x16xi1> to vector<2x16xi1>
    %257 = vector.broadcast %cst_90 : f32 to vector<2x16xf32>
    %258 = arith.select %256, %254, %257 : vector<2x16xi1>, vector<2x16xf32>
    %cst_91 = arith.constant dense<0xFF800000> : vector<2xf32>
    %259 = vector.multi_reduction <maximumf>, %258, %cst_91 [1] : vector<2x16xf32> to vector<2xf32>
    %260 = vector.shape_cast %259 : vector<2xf32> to vector<2x1xf32>
    %261 = vector.broadcast %260 : vector<2x1xf32> to vector<2x16xf32>
    %262 = arith.subf %258, %261 : vector<2x16xf32>
    %263 = math.exp %262 : vector<2x16xf32>
    %cst_92 = arith.constant dense<0.000000e+00> : vector<2xf32>
    %264 = vector.multi_reduction <add>, %263, %cst_92 [1] : vector<2x16xf32> to vector<2xf32>
    %265 = vector.shape_cast %264 : vector<2xf32> to vector<2x1xf32>
    %266 = tpu.reciprocal %265 {approx = true} : vector<2x1xf32> -> vector<2x1xf32>
    %267 = vector.broadcast %266 : vector<2x1xf32> to vector<2x16xf32>
    %268 = arith.mulf %263, %267 : vector<2x16xf32>
    %cst_93 = arith.constant 0.000000e+00 : f32
    %269 = vector.shape_cast %73 : vector<1x16xi1> to vector<1x16xi1>
    %270 = vector.broadcast %269 : vector<1x16xi1> to vector<2x16xi1>
    %271 = vector.broadcast %cst_93 : f32 to vector<2x16xf32>
    %272 = arith.select %270, %268, %271 : vector<2x16xi1>, vector<2x16xf32>
    %cst_94 = arith.constant dense<0.000000e+00> : vector<2xf32>
    %273 = vector.multi_reduction <add>, %272, %cst_94 [1] : vector<2x16xf32> to vector<2xf32>
    %274 = vector.shape_cast %273 : vector<2xf32> to vector<2x1xf32>
    %cst_95 = arith.constant 0.000000e+00 : f32
    %275 = vector.shape_cast %73 : vector<1x16xi1> to vector<1x16xi1>
    %276 = vector.broadcast %275 : vector<1x16xi1> to vector<2x16xi1>
    %277 = vector.broadcast %cst_95 : f32 to vector<2x16xf32>
    %278 = arith.select %276, %277, %268 : vector<2x16xi1>, vector<2x16xf32>
    %c0_96 = arith.constant 0 : index
    %c3_97 = arith.constant 3 : index
    %c0_98 = arith.constant 0 : index
    %c0_99 = arith.constant 0 : index
    %279 = vector.load %arg12[%c0_96, %c3_97, %c0_98, %c0_99] : memref<1x4x16x32xf32, #tpu.memory_space<vmem>>, vector<1x1x16x32xf32>
    %280 = vector.shape_cast %279 : vector<1x1x16x32xf32> to vector<16x32xf32>
    %cst_100 = arith.constant dense<0.000000e+00> : vector<2x32xf32>
    %281 = tpu.matmul %278, %280, %cst_100 {dimension_numbers = #tpu.dot_dimension_numbers<[1], [0], [0], [1], [0, 0, 1, 1], [], []>} : vector<2x16xf32>, vector<16x32xf32>, vector<2x32xf32> -> vector<2x32xf32>
    %282 = vector.broadcast %274 : vector<2x1xf32> to vector<2x32xf32>
    %283 = vector.broadcast %238 : vector<1x32xf32> to vector<2x32xf32>
    %284 = arith.mulf %282, %283 : vector<2x32xf32>
    %285 = arith.addf %281, %284 : vector<2x32xf32>
    %286 = vector.extract_strided_slice %285 {offsets = [0, 0], sizes = [1, 32], strides = [1, 1]} : vector<2x32xf32> to vector<1x32xf32>
    %287 = vector.extract_strided_slice %285 {offsets = [1, 0], sizes = [1, 32], strides = [1, 1]} : vector<2x32xf32> to vector<1x32xf32>
    %288 = tpu.concatenate %127, %128, %180, %181, %233, %234, %286, %287 in 1 : vector<1x32xf32>, vector<1x32xf32>, vector<1x32xf32>, vector<1x32xf32>, vector<1x32xf32>, vector<1x32xf32>, vector<1x32xf32>, vector<1x32xf32> -> vector<1x256xf32>
    %c0_101 = arith.constant 0 : index
    %c0_102 = arith.constant 0 : index
    %289 = vector.load %arg13[%c0_101, %c0_102] : memref<256x128xf32, #tpu.memory_space<vmem>>, vector<256x128xf32>
    %cst_103 = arith.constant dense<0.000000e+00> : vector<1x128xf32>
    %290 = tpu.matmul %288, %289, %cst_103 {dimension_numbers = #tpu.dot_dimension_numbers<[1], [0], [0], [1], [0, 0, 1, 1], [], []>} : vector<1x256xf32>, vector<256x128xf32>, vector<1x128xf32> -> vector<1x128xf32>
    %c0_104 = arith.constant 0 : index
    %c0_105 = arith.constant 0 : index
    %291 = vector.load %arg14[%c0_104, %c0_105] : memref<1x128xf32, #tpu.memory_space<vmem>>, vector<1x128xf32>
    %292 = arith.addf %290, %291 : vector<1x128xf32>
    %c0_106 = arith.constant 0 : index
    %c0_107 = arith.constant 0 : index
    %c0_108 = arith.constant 0 : index
    %293 = vector.load %arg15[%c0_106, %c0_107, %c0_108] : memref<1x1x128xf32, #tpu.memory_space<vmem>>, vector<1x1x128xf32>
    %294 = vector.shape_cast %293 : vector<1x1x128xf32> to vector<1x128xf32>
    %295 = vector.shape_cast %292 : vector<1x128xf32> to vector<1x1x128xf32>
    tpu.vector_store %arg15[%c0_106, %c0_107, %c0_108], %295 {strides = array<i32>} : memref<1x1x128xf32, #tpu.memory_space<vmem>>, vector<1x1x128xf32>,
    return
  }
  func.func @transform_0(%arg0: i32, %arg1: memref<1xi32, #tpu.memory_space<smem>>) -> (i32, i32, i32) {
    %c0_i32 = arith.constant 0 : i32
    %c0_i32_0 = arith.constant 0 : i32
    %c0_i32_1 = arith.constant 0 : i32
    return %arg0, %c0_i32, %c0_i32_0 : i32, i32, i32
  }
  func.func @transform_1(%arg0: i32, %arg1: memref<1xi32, #tpu.memory_space<smem>>) -> (i32, i32) {
    %c0_i32 = arith.constant 0 : i32
    %c0_i32_0 = arith.constant 0 : i32
    %c0_i32_1 = arith.constant 0 : i32
    return %c0_i32, %c0_i32_0 : i32, i32
  }
  func.func @transform_2(%arg0: i32, %arg1: memref<1xi32, #tpu.memory_space<smem>>) -> (i32, i32) {
    %c0_i32 = arith.constant 0 : i32
    %c0_i32_0 = arith.constant 0 : i32
    %c0_i32_1 = arith.constant 0 : i32
    return %c0_i32, %c0_i32_0 : i32, i32
  }
  func.func @transform_3(%arg0: i32, %arg1: memref<1xi32, #tpu.memory_space<smem>>) -> (i32, i32) {
    %c0_i32 = arith.constant 0 : i32
    %c0_i32_0 = arith.constant 0 : i32
    %c0_i32_1 = arith.constant 0 : i32
    return %c0_i32, %c0_i32_0 : i32, i32
  }
  func.func @transform_4(%arg0: i32, %arg1: memref<1xi32, #tpu.memory_space<smem>>) -> (i32, i32) {
    %c0_i32 = arith.constant 0 : i32
    %c0_i32_0 = arith.constant 0 : i32
    %c0_i32_1 = arith.constant 0 : i32
    return %c0_i32, %c0_i32_0 : i32, i32
  }
  func.func @transform_5(%arg0: i32, %arg1: memref<1xi32, #tpu.memory_space<smem>>) -> (i32, i32) {
    %c0_i32 = arith.constant 0 : i32
    %c0_i32_0 = arith.constant 0 : i32
    %c0_i32_1 = arith.constant 0 : i32
    return %c0_i32, %c0_i32_0 : i32, i32
  }
  func.func @transform_6(%arg0: i32, %arg1: memref<1xi32, #tpu.memory_space<smem>>) -> (i32, i32) {
    %c0_i32 = arith.constant 0 : i32
    %c0_i32_0 = arith.constant 0 : i32
    %c0_i32_1 = arith.constant 0 : i32
    return %c0_i32, %c0_i32_0 : i32, i32
  }
  func.func @transform_7(%arg0: i32, %arg1: memref<1xi32, #tpu.memory_space<smem>>) -> (i32, i32) {
    %c0_i32 = arith.constant 0 : i32
    %c0_i32_0 = arith.constant 0 : i32
    %c0_i32_1 = arith.constant 0 : i32
    return %c0_i32, %c0_i32_0 : i32, i32
  }
  func.func @transform_8(%arg0: i32, %arg1: memref<1xi32, #tpu.memory_space<smem>>) -> (i32, i32) {
    %c0_i32 = arith.constant 0 : i32
    %c0_i32_0 = arith.constant 0 : i32
    %c0_i32_1 = arith.constant 0 : i32
    return %c0_i32, %c0_i32_0 : i32, i32
  }
  func.func @transform_9(%arg0: i32, %arg1: memref<1xi32, #tpu.memory_space<smem>>) -> (i32, i32, i32, i32) {
    %c0_i32 = arith.constant 0 : i32
    %c0_i32_0 = arith.constant 0 : i32
    %c0_i32_1 = arith.constant 0 : i32
    %c0_i32_2 = arith.constant 0 : i32
    return %arg0, %c0_i32, %c0_i32_0, %c0_i32_1 : i32, i32, i32, i32
  }
  func.func @transform_10(%arg0: i32, %arg1: memref<1xi32, #tpu.memory_space<smem>>) -> (i32, i32, i32, i32) {
    %c0_i32 = arith.constant 0 : i32
    %c0_i32_0 = arith.constant 0 : i32
    %c0_i32_1 = arith.constant 0 : i32
    %c0_i32_2 = arith.constant 0 : i32
    return %arg0, %c0_i32, %c0_i32_0, %c0_i32_1 : i32, i32, i32, i32
  }
  func.func @transform_11(%arg0: i32, %arg1: memref<1xi32, #tpu.memory_space<smem>>) -> (i32, i32) {
    %c0_i32 = arith.constant 0 : i32
    %c0_i32_0 = arith.constant 0 : i32
    %c0_i32_1 = arith.constant 0 : i32
    return %c0_i32, %c0_i32_0 : i32, i32
  }
  func.func @transform_12(%arg0: i32, %arg1: memref<1xi32, #tpu.memory_space<smem>>) -> (i32, i32) {
    %c0_i32 = arith.constant 0 : i32
    %c0_i32_0 = arith.constant 0 : i32
    %c0_i32_1 = arith.constant 0 : i32
    return %c0_i32, %c0_i32_0 : i32, i32
  }
  func.func @transform_13(%arg0: i32, %arg1: memref<1xi32, #tpu.memory_space<smem>>) -> (i32, i32, i32) {
    %c0_i32 = arith.constant 0 : i32
    %c0_i32_0 = arith.constant 0 : i32
    %c0_i32_1 = arith.constant 0 : i32
    return %arg0, %c0_i32, %c0_i32_0 : i32, i32, i32
  }
  func.func @transform_14(%arg0: i32, %arg1: memref<1xi32, #tpu.memory_space<smem>>) -> (i32, i32, i32) {
    %c0_i32 = arith.constant 0 : i32
    %c0_i32_0 = arith.constant 0 : i32
    %c0_i32_1 = arith.constant 0 : i32
    return %arg0, %c0_i32, %c0_i32_0 : i32, i32, i32
  }
  func.func @transform_15(%arg0: i32, %arg1: memref<1xi32, #tpu.memory_space<smem>>) -> (i32, i32, i32) {
    %c0_i32 = arith.constant 0 : i32
    %c0_i32_0 = arith.constant 0 : i32
    %c0_i32_1 = arith.constant 0 : i32
    return %arg0, %c0_i32, %c0_i32_0 : i32, i32, i32
  }
}

</mosaic_0001>

<llo_original>
// kernel: tpu_custom_call.1
$region0: #{tpu_custom_call.1}
  #allocation0 [shape = 'u32[]', space=smem, size = 0x4, offset = 0x4, fixed_abs, tag = 'smem constant byte address 0x4 - core index']
  #allocation1 [shape = 'u32[144,128]{1,0:T(1,128)}', space=vmem, size = 0x12000, scoped, tag = 'internal scratch']
  #allocation2 [shape = 's32[1]{0}', space=sflag, size = 0x4, scoped, tag = 'scoped memory for tpu_custom_call.1']
  #allocation3 [shape = 's32[1]{0:T(128)S(6)}', space=smem, size = 0x200, scoped, tag = 'prefetched SMEM operand 0']
  %s0 = inlined_call_operand.<no memory space> [shape: s32[1], index: 0, kind: input, shape index: {}]
  %s1 = inlined_call_operand.vmem [shape: f32[2,1,128], index: 1, kind: input, shape index: {}]
  %s2 = inlined_call_operand.vmem [shape: f32[128,256], index: 2, kind: input, shape index: {}]
  %s3 = inlined_call_operand.vmem [shape: f32[1,256], index: 3, kind: input, shape index: {}]
  %s4 = inlined_call_operand.vmem [shape: f32[128,128], index: 4, kind: input, shape index: {}]
  %s5 = inlined_call_operand.vmem [shape: f32[1,128], index: 5, kind: input, shape index: {}]
  %s6 = inlined_call_operand.hbm [shape: f32[128,128], index: 6, kind: input, shape index: {}]
  %s7 = inlined_call_operand.vmem [shape: f32[1,128], index: 7, kind: input, shape index: {}]
  %s8 = inlined_call_operand.vmem [shape: f32[1,16], index: 8, kind: input, shape index: {}]
  %s9 = inlined_call_operand.vmem [shape: f32[1,16], index: 9, kind: input, shape index: {}]
  %s10 = inlined_call_operand.vmem [shape: f32[2,4,32,16], index: 10, kind: input, shape index: {}]
  %s11 = inlined_call_operand.hbm [shape: f32[2,4,16,32], index: 11, kind: input, shape index: {}]
  %s12 = inlined_call_operand.hbm [shape: f32[256,128], index: 12, kind: input, shape index: {}]
  %s13 = inlined_call_operand.vmem [shape: f32[1,128], index: 13, kind: input, shape index: {}]
  %s14 = inlined_call_operand.hbm [shape: f32[2,1,128], index: 14, kind: output, shape index: {0}]
  %s15 = inlined_call_operand.hbm [shape: f32[2,4,32], index: 15, kind: output, shape index: {1}]
  %s16 = inlined_call_operand.hbm [shape: f32[2,4,32], index: 16, kind: output, shape index: {2}]
  %17 = xla_tuple %s14, %s15, %s16
  %s18 = sld [smem:[#allocation0]]
  $region113: #{tpu_custom_call.1} parent=0
    _
  %s20 = ssub.s32 1, %s18
  %s21 = scalar_select 0, %s20, %s18
  %22 = sst [smem:[#allocation3]] %s0
  $region1: #{tpu_custom_call.1} parent=0
    #allocation4 [shape = 'u8[65536]{0}', space=vmem, size = 0x10000, scoped, tag = 'input window, operand 6, single buffered']
    #allocation5 [shape = 's32[2]{0}', space=sflag, size = 0x8, scoped, tag = 'scoped memory for tpu_custom_call.1']
    #allocation6 [shape = 's32[2]{0}', space=sflag, size = 0x8, scoped, tag = 'scoped memory for tpu_custom_call.1']
    #allocation7 [shape = 'u8[65536]{0}', space=vmem, size = 0x10000, scoped, tag = 'input window, operand 11']
    #allocation8 [shape = 's32[2]{0}', space=sflag, size = 0x8, scoped, tag = 'scoped memory for tpu_custom_call.1']
    #allocation9 [shape = 'u8[131072]{0}', space=vmem, size = 0x20000, scoped, tag = 'input window, operand 12, single buffered']
    #allocation10 [shape = 'u8[1024]{0}', space=vmem, size = 0x400, scoped, tag = 'output window, operand 0']
    #allocation11 [shape = 'u8[4096]{0}', space=vmem, size = 0x1000, scoped, tag = 'output window, operand 1']
    #allocation12 [shape = 's32[2]{0}', space=sflag, size = 0x8, scoped, tag = 'scoped memory for tpu_custom_call.1']
    #allocation13 [shape = 'u8[4096]{0}', space=vmem, size = 0x1000, scoped, tag = 'output window, operand 2']
    %23 = vsyncpa [#allocation5], 0
    %24 = vsyncpa [#allocation8], 0
    %s25 = scalar_lea.sflag [#allocation8], 1
    %26 = vsyncpa %s25, 0
    %27 = vsyncpa [#allocation6], 0
    %s28 = scalar_lea.sflag [#allocation6], 1
    %29 = vsyncpa %s28, 0
    %30 = vsyncpa [#allocation12], 0
    %s31 = scalar_lea.sflag [#allocation12], 1
    %32 = vsyncpa %s31, 0
    loop: start=0, step=1, limit=4
    $region2: #{tpu_custom_call.1} parent=1 // loop_pre_header
      _
    $region3: #{tpu_custom_call.1} parent=1 // loop_header
      %s34 = sphi 0, %s38
      %p35 = scmp.ge.s32.totalorder %s34, 4
      %s44 = sphi 0, %s46
      %s47 = sphi 0, %s44
      %s48 = sphi 0, %s47
      %s64 = sphi 0, %s48
      %s68 = sphi 0, %s68
      %s70 = sphi 0, %s68
      %s71 = sphi 0, %s70
      %s85 = sphi 0, %s71
      %s89 = sphi 0, %s89
      %s91 = sphi 0, %s89
      %s92 = sphi 0, %s91
      %s106 = sphi 0, %s92
      %s110 = sphi 0, %s110
      %s112 = sphi 0, %s110
      %s113 = sphi 0, %s112
      %s127 = sphi 0, %s113
      %s131 = sphi 0, %s131
      %s133 = sphi 0, %s131
      %s134 = sphi 0, %s133
      %s148 = sphi 0, %s134
      %s152 = sphi 0, %s152
      %s154 = sphi 0, %s152
      %s155 = sphi 0, %s154
      %s169 = sphi 0, %s155
      %s173 = sphi 0, %s173
      %s175 = sphi 0, %s173
      %s176 = sphi 0, %s175
      %s190 = sphi 0, %s176
      %s194 = sphi 0, %s194
      %s196 = sphi 0, %s194
      %s197 = sphi 0, %s196
      %s211 = sphi 0, %s197
      %s215 = sphi 0, %s215
      %s217 = sphi 0, %s215
      %s218 = sphi 0, %s217
      %s232 = sphi 0, %s218
      %s238 = sphi 0, %s240
      %s241 = sphi 0, %s238
      %s242 = sphi 0, %s241
      %s258 = sphi 0, %s242
      %s264 = sphi 0, %s266
      %s267 = sphi 0, %s264
      %s268 = sphi 0, %s267
      %s284 = sphi 0, %s268
      %s288 = sphi 0, %s288
      %s290 = sphi 0, %s288
      %s291 = sphi 0, %s290
      %s305 = sphi 0, %s291
      %s309 = sphi 0, %s309
      %s311 = sphi 0, %s309
      %s312 = sphi 0, %s311
      %s326 = sphi 0, %s312
      %s332 = sphi 0, %s334
      %s335 = sphi 0, %s332
      %s336 = sphi 0, %s335
      %s352 = sphi 0, %s336
      %s358 = sphi 0, %s360
      %s361 = sphi 0, %s358
      %s362 = sphi 0, %s361
      %s378 = sphi 0, %s362
      %s384 = sphi 0, %s386
      %s387 = sphi 0, %s384
      %s388 = sphi 0, %s387
      %s404 = sphi 0, %s388
    $region4: #{tpu_custom_call.1} parent=1 // loop_header_branch
      %37 = sbr.rel (%p35) target = $region8
    $region5: #{tpu_custom_call.1} parent=1 // loop_body
      %s39 = ssub.s32 %s34, 1
      %s40 = ssub.s32 %s34, 2
      %s41 = sadd.s32 %s34, 1
      %s42 = ssub.s32 %s34, %s41
      %p43 = scmp.eq.s32.totalorder %s42, 0
      %s45 = sadd.s32 %s44, 1
      %s46 = scalar_select %p43, %s44, %s45
      %p49 = pneg %p43
      %p50 = scmp.eq.s32.totalorder %s34, 1
      %p51 = por %p49, %p50
      %p52 = scmp.ne.s32.totalorder %s44, %s47
      %p53 = scmp.eq.s32.totalorder %s34, 0
      %p54 = por %p52, %p53
      %p55 = scmp.ne.s32.totalorder %s44, %s47
      %p56 = scmp.eq.s32.totalorder %s39, 1
      %p57 = por %p55, %p56
      %p58 = scmp.ne.s32.totalorder %s47, %s48
      %p59 = scmp.eq.s32.totalorder %s39, 0
      %p60 = por %p58, %p59
      %p61 = scmp.ne.s32.totalorder %s47, %s48
      %p62 = scmp.eq.s32.totalorder %s40, 1
      %p63 = por %p61, %p62
      %p65 = scmp.ne.s32.totalorder %s48, %s64
      %p66 = scmp.eq.s32.totalorder %s40, 0
      %p67 = por %p65, %p66
      %s69 = sadd.s32 %s68, 1
      %p72 = scmp.eq.s32.totalorder %s34, 1
      %p73 = scmp.ne.s32.totalorder %s68, %s70
      %p74 = scmp.eq.s32.totalorder %s34, 0
      %p75 = por %p73, %p74
      %p76 = scmp.ne.s32.totalorder %s68, %s70
      %p77 = scmp.eq.s32.totalorder %s39, 1
      %p78 = por %p76, %p77
      %p79 = scmp.ne.s32.totalorder %s70, %s71
      %p80 = scmp.eq.s32.totalorder %s39, 0
      %p81 = por %p79, %p80
      %p82 = scmp.ne.s32.totalorder %s70, %s71
      %p83 = scmp.eq.s32.totalorder %s40, 1
      %p84 = por %p82, %p83
      %p86 = scmp.ne.s32.totalorder %s71, %s85
      %p87 = scmp.eq.s32.totalorder %s40, 0
      %p88 = por %p86, %p87
      %s90 = sadd.s32 %s89, 1
      %p93 = scmp.eq.s32.totalorder %s34, 1
      %p94 = scmp.ne.s32.totalorder %s89, %s91
      %p95 = scmp.eq.s32.totalorder %s34, 0
      %p96 = por %p94, %p95
      %p97 = scmp.ne.s32.totalorder %s89, %s91
      %p98 = scmp.eq.s32.totalorder %s39, 1
      %p99 = por %p97, %p98
      %p100 = scmp.ne.s32.totalorder %s91, %s92
      %p101 = scmp.eq.s32.totalorder %s39, 0
      %p102 = por %p100, %p101
      %p103 = scmp.ne.s32.totalorder %s91, %s92
      %p104 = scmp.eq.s32.totalorder %s40, 1
      %p105 = por %p103, %p104
      %p107 = scmp.ne.s32.totalorder %s92, %s106
      %p108 = scmp.eq.s32.totalorder %s40, 0
      %p109 = por %p107, %p108
      %s111 = sadd.s32 %s110, 1
      %p114 = scmp.eq.s32.totalorder %s34, 1
      %p115 = scmp.ne.s32.totalorder %s110, %s112
      %p116 = scmp.eq.s32.totalorder %s34, 0
      %p117 = por %p115, %p116
      %p118 = scmp.ne.s32.totalorder %s110, %s112
      %p119 = scmp.eq.s32.totalorder %s39, 1
      %p120 = por %p118, %p119
      %p121 = scmp.ne.s32.totalorder %s112, %s113
      %p122 = scmp.eq.s32.totalorder %s39, 0
      %p123 = por %p121, %p122
      %p124 = scmp.ne.s32.totalorder %s112, %s113
      %p125 = scmp.eq.s32.totalorder %s40, 1
      %p126 = por %p124, %p125
      %p128 = scmp.ne.s32.totalorder %s113, %s127
      %p129 = scmp.eq.s32.totalorder %s40, 0
      %p130 = por %p128, %p129
      %s132 = sadd.s32 %s131, 1
      %p135 = scmp.eq.s32.totalorder %s34, 1
      %p136 = scmp.ne.s32.totalorder %s131, %s133
      %p137 = scmp.eq.s32.totalorder %s34, 0
      %p138 = por %p136, %p137
      %p139 = scmp.ne.s32.totalorder %s131, %s133
      %p140 = scmp.eq.s32.totalorder %s39, 1
      %p141 = por %p139, %p140
      %p142 = scmp.ne.s32.totalorder %s133, %s134
      %p143 = scmp.eq.s32.totalorder %s39, 0
      %p144 = por %p142, %p143
      %p145 = scmp.ne.s32.totalorder %s133, %s134
      %p146 = scmp.eq.s32.totalorder %s40, 1
      %p147 = por %p145, %p146
      %p149 = scmp.ne.s32.totalorder %s134, %s148
      %p150 = scmp.eq.s32.totalorder %s40, 0
      %p151 = por %p149, %p150
      %s153 = sadd.s32 %s152, 1
      %p156 = scmp.eq.s32.totalorder %s34, 1
      %p157 = scmp.ne.s32.totalorder %s152, %s154
      %p158 = scmp.eq.s32.totalorder %s34, 0
      %p159 = por %p157, %p158
      %p160 = scmp.ne.s32.totalorder %s152, %s154
      %p161 = scmp.eq.s32.totalorder %s39, 1
      %p162 = por %p160, %p161
      %p163 = scmp.ne.s32.totalorder %s154, %s155
      %p164 = scmp.eq.s32.totalorder %s39, 0
      %p165 = por %p163, %p164
      %p166 = scmp.ne.s32.totalorder %s154, %s155
      %p167 = scmp.eq.s32.totalorder %s40, 1
      %p168 = por %p166, %p167
      %p170 = scmp.ne.s32.totalorder %s155, %s169
      %p171 = scmp.eq.s32.totalorder %s40, 0
      %p172 = por %p170, %p171
      %s174 = sadd.s32 %s173, 1
      %p177 = scmp.eq.s32.totalorder %s34, 1
      %p178 = scmp.ne.s32.totalorder %s173, %s175
      %p179 = scmp.eq.s32.totalorder %s34, 0
      %p180 = por %p178, %p179
      %p181 = scmp.ne.s32.totalorder %s173, %s175
      %p182 = scmp.eq.s32.totalorder %s39, 1
      %p183 = por %p181, %p182
      %p184 = scmp.ne.s32.totalorder %s175, %s176
      %p185 = scmp.eq.s32.totalorder %s39, 0
      %p186 = por %p184, %p185
      %p187 = scmp.ne.s32.totalorder %s175, %s176
      %p188 = scmp.eq.s32.totalorder %s40, 1
      %p189 = por %p187, %p188
      %p191 = scmp.ne.s32.totalorder %s176, %s190
      %p192 = scmp.eq.s32.totalorder %s40, 0
      %p193 = por %p191, %p192
      %s195 = sadd.s32 %s194, 1
      %p198 = scmp.eq.s32.totalorder %s34, 1
      %p199 = scmp.ne.s32.totalorder %s194, %s196
      %p200 = scmp.eq.s32.totalorder %s34, 0
      %p201 = por %p199, %p200
      %p202 = scmp.ne.s32.totalorder %s194, %s196
      %p203 = scmp.eq.s32.totalorder %s39, 1
      %p204 = por %p202, %p203
      %p205 = scmp.ne.s32.totalorder %s196, %s197
      %p206 = scmp.eq.s32.totalorder %s39, 0
      %p207 = por %p205, %p206
      %p208 = scmp.ne.s32.totalorder %s196, %s197
      %p209 = scmp.eq.s32.totalorder %s40, 1
      %p210 = por %p208, %p209
      %p212 = scmp.ne.s32.totalorder %s197, %s211
      %p213 = scmp.eq.s32.totalorder %s40, 0
      %p214 = por %p212, %p213
      %s216 = sadd.s32 %s215, 1
      %p219 = scmp.eq.s32.totalorder %s34, 1
      %p220 = scmp.ne.s32.totalorder %s215, %s217
      %p221 = scmp.eq.s32.totalorder %s34, 0
      %p222 = por %p220, %p221
      %p223 = scmp.ne.s32.totalorder %s215, %s217
      %p224 = scmp.eq.s32.totalorder %s39, 1
      %p225 = por %p223, %p224
      %p226 = scmp.ne.s32.totalorder %s217, %s218
      %p227 = scmp.eq.s32.totalorder %s39, 0
      %p228 = por %p226, %p227
      %p229 = scmp.ne.s32.totalorder %s217, %s218
      %p230 = scmp.eq.s32.totalorder %s40, 1
      %p231 = por %p229, %p230
      %p233 = scmp.ne.s32.totalorder %s218, %s232
      %p234 = scmp.eq.s32.totalorder %s40, 0
      %p235 = por %p233, %p234
      %s236 = ssub.s32 %s34, %s41
      %p237 = scmp.eq.s32.totalorder %s236, 0
      %s239 = sadd.s32 %s238, 1
      %s240 = scalar_select %p237, %s238, %s239
      %p243 = pneg %p237
      %p244 = scmp.eq.s32.totalorder %s34, 1
      %p245 = por %p243, %p244
      %p246 = scmp.ne.s32.totalorder %s238, %s241
      %p247 = scmp.eq.s32.totalorder %s34, 0
      %p248 = por %p246, %p247
      %p249 = scmp.ne.s32.totalorder %s238, %s241
      %p250 = scmp.eq.s32.totalorder %s39, 1
      %p251 = por %p249, %p250
      %p252 = scmp.ne.s32.totalorder %s241, %s242
      %p253 = scmp.eq.s32.totalorder %s39, 0
      %p254 = por %p252, %p253
      %p255 = scmp.ne.s32.totalorder %s241, %s242
      %p256 = scmp.eq.s32.totalorder %s40, 1
      %p257 = por %p255, %p256
      %p259 = scmp.ne.s32.totalorder %s242, %s258
      %p260 = scmp.eq.s32.totalorder %s40, 0
      %p261 = por %p259, %p260
      %s262 = ssub.s32 %s34, %s41
      %p263 = scmp.eq.s32.totalorder %s262, 0
      %s265 = sadd.s32 %s264, 1
      %s266 = scalar_select %p263, %s264, %s265
      %p269 = pneg %p263
      %p270 = scmp.eq.s32.totalorder %s34, 1
      %p271 = por %p269, %p270
      %p272 = scmp.ne.s32.totalorder %s264, %s267
      %p273 = scmp.eq.s32.totalorder %s34, 0
      %p274 = por %p272, %p273
      %p275 = scmp.ne.s32.totalorder %s264, %s267
      %p276 = scmp.eq.s32.totalorder %s39, 1
      %p277 = por %p275, %p276
      %p278 = scmp.ne.s32.totalorder %s267, %s268
      %p279 = scmp.eq.s32.totalorder %s39, 0
      %p280 = por %p278, %p279
      %p281 = scmp.ne.s32.totalorder %s267, %s268
      %p282 = scmp.eq.s32.totalorder %s40, 1
      %p283 = por %p281, %p282
      %p285 = scmp.ne.s32.totalorder %s268, %s284
      %p286 = scmp.eq.s32.totalorder %s40, 0
      %p287 = por %p285, %p286
      %s289 = sadd.s32 %s288, 1
      %p292 = scmp.eq.s32.totalorder %s34, 1
      %p293 = scmp.ne.s32.totalorder %s288, %s290
      %p294 = scmp.eq.s32.totalorder %s34, 0
      %p295 = por %p293, %p294
      %p296 = scmp.ne.s32.totalorder %s288, %s290
      %p297 = scmp.eq.s32.totalorder %s39, 1
      %p298 = por %p296, %p297
      %p299 = scmp.ne.s32.totalorder %s290, %s291
      %p300 = scmp.eq.s32.totalorder %s39, 0
      %p301 = por %p299, %p300
      %p302 = scmp.ne.s32.totalorder %s290, %s291
      %p303 = scmp.eq.s32.totalorder %s40, 1
      %p304 = por %p302, %p303
      %p306 = scmp.ne.s32.totalorder %s291, %s305
      %p307 = scmp.eq.s32.totalorder %s40, 0
      %p308 = por %p306, %p307
      %s310 = sadd.s32 %s309, 1
      %p313 = scmp.eq.s32.totalorder %s34, 1
      %p314 = scmp.ne.s32.totalorder %s309, %s311
      %p315 = scmp.eq.s32.totalorder %s34, 0
      %p316 = por %p314, %p315
      %p317 = scmp.ne.s32.totalorder %s309, %s311
      %p318 = scmp.eq.s32.totalorder %s39, 1
      %p319 = por %p317, %p318
      %p320 = scmp.ne.s32.totalorder %s311, %s312
      %p321 = scmp.eq.s32.totalorder %s39, 0
      %p322 = por %p320, %p321
      %p323 = scmp.ne.s32.totalorder %s311, %s312
      %p324 = scmp.eq.s32.totalorder %s40, 1
      %p325 = por %p323, %p324
      %p327 = scmp.ne.s32.totalorder %s312, %s326
      %p328 = scmp.eq.s32.totalorder %s40, 0
      %p329 = por %p327, %p328
      %s330 = ssub.s32 %s34, %s41
      %p331 = scmp.eq.s32.totalorder %s330, 0
      %s333 = sadd.s32 %s332, 1
      %s334 = scalar_select %p331, %s332, %s333
      %p337 = pneg %p331
      %p338 = scmp.eq.s32.totalorder %s34, 1
      %p339 = por %p337, %p338
      %p340 = scmp.ne.s32.totalorder %s332, %s335
      %p341 = scmp.eq.s32.totalorder %s34, 0
      %p342 = por %p340, %p341
      %p343 = scmp.ne.s32.totalorder %s332, %s335
      %p344 = scmp.eq.s32.totalorder %s39, 1
      %p345 = por %p343, %p344
      %p346 = scmp.ne.s32.totalorder %s335, %s336
      %p347 = scmp.eq.s32.totalorder %s39, 0
      %p348 = por %p346, %p347
      %p349 = scmp.ne.s32.totalorder %s335, %s336
      %p350 = scmp.eq.s32.totalorder %s40, 1
      %p351 = por %p349, %p350
      %p353 = scmp.ne.s32.totalorder %s336, %s352
      %p354 = scmp.eq.s32.totalorder %s40, 0
      %p355 = por %p353, %p354
      %s356 = ssub.s32 %s34, %s41
      %p357 = scmp.eq.s32.totalorder %s356, 0
      %s359 = sadd.s32 %s358, 1
      %s360 = scalar_select %p357, %s358, %s359
      %p363 = pneg %p357
      %p364 = scmp.eq.s32.totalorder %s34, 1
      %p365 = por %p363, %p364
      %p366 = scmp.ne.s32.totalorder %s358, %s361
      %p367 = scmp.eq.s32.totalorder %s34, 0
      %p368 = por %p366, %p367
      %p369 = scmp.ne.s32.totalorder %s358, %s361
      %p370 = scmp.eq.s32.totalorder %s39, 1
      %p371 = por %p369, %p370
      %p372 = scmp.ne.s32.totalorder %s361, %s362
      %p373 = scmp.eq.s32.totalorder %s39, 0
      %p374 = por %p372, %p373
      %p375 = scmp.ne.s32.totalorder %s361, %s362
      %p376 = scmp.eq.s32.totalorder %s40, 1
      %p377 = por %p375, %p376
      %p379 = scmp.ne.s32.totalorder %s362, %s378
      %p380 = scmp.eq.s32.totalorder %s40, 0
      %p381 = por %p379, %p380
      %s382 = ssub.s32 %s34, %s41
      %p383 = scmp.eq.s32.totalorder %s382, 0
      %s385 = sadd.s32 %s384, 1
      %s386 = scalar_select %p383, %s384, %s385
      %p389 = pneg %p383
      %p390 = scmp.eq.s32.totalorder %s34, 1
      %p391 = por %p389, %p390
      %p392 = scmp.ne.s32.totalorder %s384, %s387
      %p393 = scmp.eq.s32.totalorder %s34, 0
      %p394 = por %p392, %p393
      %p395 = scmp.ne.s32.totalorder %s384, %s387
      %p396 = scmp.eq.s32.totalorder %s39, 1
      %p397 = por %p395, %p396
      %p398 = scmp.ne.s32.totalorder %s387, %s388
      %p399 = scmp.eq.s32.totalorder %s39, 0
      %p400 = por %p398, %p399
      %p401 = scmp.ne.s32.totalorder %s387, %s388
      %p402 = scmp.eq.s32.totalorder %s40, 1
      %p403 = por %p401, %p402
      %p405 = scmp.ne.s32.totalorder %s388, %s404
      %p406 = scmp.eq.s32.totalorder %s40, 0
      %p407 = por %p405, %p406
      %p408 = scmp.le.s32.totalorder 1, %s34
      %p409 = scmp.lt.s32.totalorder %s34, 3
      %p410 = pnand %p408, %p409
      %p411 = pneg %p410
      // Predicated region
      $region9: #{tpu_custom_call.1} parent=5 // pred_check
        _
      $region10: #{tpu_custom_call.1} parent=5 // pred_check_branch
        %413 = sbr.rel (%p410) target = $region12
      $region11: #{tpu_custom_call.1} parent=5 // pred_region
        %s414 = ssub.s32 %s34, 1
        // Predicated region
        $region13: #{tpu_custom_call.1} parent=11 // pred_check
          %p415 = pneg %p81
        $region14: #{tpu_custom_call.1} parent=11 // pred_check_branch
          %417 = sbr.rel (%p415) target = $region16
        $region15: #{tpu_custom_call.1} parent=11 // pred_region
          _
        $region16: #{tpu_custom_call.1} parent=11 // pred_fallthru
          _
        // Predicated region
        $region17: #{tpu_custom_call.1} parent=11 // pred_check
          %p418 = pneg %p102
        $region18: #{tpu_custom_call.1} parent=11 // pred_check_branch
          %420 = sbr.rel (%p418) target = $region20
        $region19: #{tpu_custom_call.1} parent=11 // pred_region
          _
        $region20: #{tpu_custom_call.1} parent=11 // pred_fallthru
          _
        // Predicated region
        $region21: #{tpu_custom_call.1} parent=11 // pred_check
          %p421 = pneg %p123
        $region22: #{tpu_custom_call.1} parent=11 // pred_check_branch
          %423 = sbr.rel (%p421) target = $region24
        $region23: #{tpu_custom_call.1} parent=11 // pred_region
          _
        $region24: #{tpu_custom_call.1} parent=11 // pred_fallthru
          _
        // Predicated region
        $region25: #{tpu_custom_call.1} parent=11 // pred_check
          %p424 = pneg %p144
        $region26: #{tpu_custom_call.1} parent=11 // pred_check_branch
          %426 = sbr.rel (%p424) target = $region28
        $region27: #{tpu_custom_call.1} parent=11 // pred_region
          _
        $region28: #{tpu_custom_call.1} parent=11 // pred_fallthru
          _
        // Predicated region
        $region29: #{tpu_custom_call.1} parent=11 // pred_check
          %p427 = pneg %p165
        $region30: #{tpu_custom_call.1} parent=11 // pred_check_branch
          %429 = sbr.rel (%p427) target = $region32
        $region31: #{tpu_custom_call.1} parent=11 // pred_region
          %s431 = ssub.s32 2048, 2048
          %432 = vsyncadd [#allocation5], %s431
          %s433 = sshll.u32 [#allocation4], 4
          %s434 = int_to_ptr.vmem [resolvable:$true] %s433
          %439 = dma.hbm_to_vmem [thread:$0]  %s6, 2048, %s434, [#allocation5], 128, 128, 8
        $region32: #{tpu_custom_call.1} parent=11 // pred_fallthru
          _
        // Predicated region
        $region33: #{tpu_custom_call.1} parent=11 // pred_check
          %p440 = pneg %p186
        $region34: #{tpu_custom_call.1} parent=11 // pred_check_branch
          %442 = sbr.rel (%p440) target = $region36
        $region35: #{tpu_custom_call.1} parent=11 // pred_region
          _
        $region36: #{tpu_custom_call.1} parent=11 // pred_fallthru
          _
        // Predicated region
        $region37: #{tpu_custom_call.1} parent=11 // pred_check
          %p443 = pneg %p207
        $region38: #{tpu_custom_call.1} parent=11 // pred_check_branch
          %445 = sbr.rel (%p443) target = $region40
        $region39: #{tpu_custom_call.1} parent=11 // pred_region
          _
        $region40: #{tpu_custom_call.1} parent=11 // pred_fallthru
          _
        // Predicated region
        $region41: #{tpu_custom_call.1} parent=11 // pred_check
          %p446 = pneg %p228
        $region42: #{tpu_custom_call.1} parent=11 // pred_check_branch
          %448 = sbr.rel (%p446) target = $region44
        $region43: #{tpu_custom_call.1} parent=11 // pred_region
          _
        $region44: #{tpu_custom_call.1} parent=11 // pred_fallthru
          _
        // Predicated region
        $region45: #{tpu_custom_call.1} parent=11 // pred_check
          %p449 = pneg %p301
        $region46: #{tpu_custom_call.1} parent=11 // pred_check_branch
          %451 = sbr.rel (%p449) target = $region48
        $region47: #{tpu_custom_call.1} parent=11 // pred_region
          %s453 = ssub.s32 4096, 4096
          %454 = vsyncadd [#allocation8], %s453
          %s455 = sshll.u32 [#allocation9], 4
          %s456 = int_to_ptr.vmem [resolvable:$true] %s455
          %461 = dma.hbm_to_vmem [thread:$0]  %s12, 4096, %s456, [#allocation8], 128, 128, 8
        $region48: #{tpu_custom_call.1} parent=11 // pred_fallthru
          _
        // Predicated region
        $region49: #{tpu_custom_call.1} parent=11 // pred_check
          %p462 = pneg %p322
        $region50: #{tpu_custom_call.1} parent=11 // pred_check_branch
          %464 = sbr.rel (%p462) target = $region52
        $region51: #{tpu_custom_call.1} parent=11 // pred_region
          _
        $region52: #{tpu_custom_call.1} parent=11 // pred_fallthru
          _
      $region12: #{tpu_custom_call.1} parent=5 // pred_fallthru
        _
      %p465 = scmp.lt.s32.totalorder %s34, 2
      // Predicated region
      $region53: #{tpu_custom_call.1} parent=5 // pred_check
        %p466 = pneg %p465
      $region54: #{tpu_custom_call.1} parent=5 // pred_check_branch
        %468 = sbr.rel (%p466) target = $region56
      $region55: #{tpu_custom_call.1} parent=5 // pred_region
        // Predicated region
        $region57: #{tpu_custom_call.1} parent=55 // pred_check
          %p469 = pneg %p54
        $region58: #{tpu_custom_call.1} parent=55 // pred_check_branch
          %471 = sbr.rel (%p469) target = $region60
        $region59: #{tpu_custom_call.1} parent=55 // pred_region
          %p472 = scmp.lt.s32.totalorder %s34, 1
          %s473 = scalar_select %p472, %s34, 1
          %s474 = scalar_lea.vmem %s1, %s473
        $region60: #{tpu_custom_call.1} parent=55 // pred_fallthru
          _
        // Predicated region
        $region61: #{tpu_custom_call.1} parent=55 // pred_check
          %p475 = pneg %p248
        $region62: #{tpu_custom_call.1} parent=55 // pred_check_branch
          %477 = sbr.rel (%p475) target = $region64
        $region63: #{tpu_custom_call.1} parent=55 // pred_region
          %p478 = scmp.lt.s32.totalorder %s34, 1
          %s479 = scalar_select %p478, %s34, 1
          %s480 = smul.addr %s479, 16
          %s481 = smul.addr %s480, 8
          %s482 = scalar_lea.vmem %s10, %s481
        $region64: #{tpu_custom_call.1} parent=55 // pred_fallthru
          _
        // Predicated region
        $region65: #{tpu_custom_call.1} parent=55 // pred_check
          %p483 = pneg %p274
        $region66: #{tpu_custom_call.1} parent=55 // pred_check_branch
          %485 = sbr.rel (%p483) target = $region68
        $region67: #{tpu_custom_call.1} parent=55 // pred_region
          %s486 = sand.u32 %s34, 1
          %s487 = scalar_lea.sflag [#allocation8], %s486
          %s488 = sand.u32 %s264, 1
          %s489 = smul.addr %s488, 64
          %s490 = scalar_lea.vmem [#allocation7], %s489
          %s492 = ssub.s32 1024, 1024
          %493 = vsyncadd %s487, %s492
          %s494 = smul.addr %s34, 8
          %s495 = smul.addr %s494, 128
          %s496 = scalar_lea.hbm %s11, %s495
          %s497 = sshll.u32 %s490, 4
          %s498 = int_to_ptr.vmem [resolvable:$true] %s497
          %503 = dma.hbm_to_vmem [thread:$0]  %s496, 1024, %s498, %s487, 128, 128, 8
        $region68: #{tpu_custom_call.1} parent=55 // pred_fallthru
          _
      $region56: #{tpu_custom_call.1} parent=5 // pred_fallthru
        _
      %p504 = scmp.le.s32.totalorder 1, %s34
      %p505 = scmp.lt.s32.totalorder %s34, 3
      %p506 = pnand %p504, %p505
      %p507 = pneg %p506
      // Predicated region
      $region69: #{tpu_custom_call.1} parent=5 // pred_check
        _
      $region70: #{tpu_custom_call.1} parent=5 // pred_check_branch
        %509 = sbr.rel (%p506) target = $region72
      $region71: #{tpu_custom_call.1} parent=5 // pred_region
        %s510 = ssub.s32 %s34, 1
        // Predicated region
        $region73: #{tpu_custom_call.1} parent=71 // pred_check
          %p511 = pneg %p165
        $region74: #{tpu_custom_call.1} parent=71 // pred_check_branch
          %513 = sbr.rel (%p511) target = $region76
        $region75: #{tpu_custom_call.1} parent=71 // pred_region
          %514 = dma.done [#allocation5], 2048
        $region76: #{tpu_custom_call.1} parent=71 // pred_fallthru
          _
        %s515 = sand.u32 %s39, 1
        %s516 = scalar_lea.sflag [#allocation8], %s515
        %s517 = sand.u32 %s267, 1
        %s518 = smul.addr %s517, 64
        %s519 = scalar_lea.vmem [#allocation7], %s518
        // Predicated region
        $region77: #{tpu_custom_call.1} parent=71 // pred_check
          %p520 = pneg %p280
        $region78: #{tpu_custom_call.1} parent=71 // pred_check_branch
          %522 = sbr.rel (%p520) target = $region80
        $region79: #{tpu_custom_call.1} parent=71 // pred_region
          %523 = dma.done %s516, 1024
        $region80: #{tpu_custom_call.1} parent=71 // pred_fallthru
          _
        // Predicated region
        $region81: #{tpu_custom_call.1} parent=71 // pred_check
          %p524 = pneg %p301
        $region82: #{tpu_custom_call.1} parent=71 // pred_check_branch
          %526 = sbr.rel (%p524) target = $region84
        $region83: #{tpu_custom_call.1} parent=71 // pred_region
          %527 = dma.done [#allocation8], 4096
        $region84: #{tpu_custom_call.1} parent=71 // pred_fallthru
          _
        %p528 = scmp.lt.s32.totalorder %s39, 1
        %s529 = scalar_select %p528, %s39, 1
        %s530 = scalar_lea.vmem %s1, %s529
        %p531 = pneg %p60
        %p532 = pneg %p57
        %p533 = pneg %p81
        %p534 = pneg %p78
        %p535 = pneg %p102
        %p536 = pneg %p99
        %p537 = pneg %p123
        %p538 = pneg %p120
        %p539 = pneg %p144
        %p540 = pneg %p141
        %p541 = pneg %p165
        %p542 = pneg %p162
        %p543 = pneg %p186
        %p544 = pneg %p183
        %p545 = pneg %p207
        %p546 = pneg %p204
        %p547 = pneg %p228
        %p548 = pneg %p225
        %p549 = scmp.lt.s32.totalorder %s39, 1
        %s550 = scalar_select %p549, %s39, 1
        %s551 = smul.addr %s550, 16
        %s552 = smul.addr %s551, 8
        %s553 = scalar_lea.vmem %s10, %s552
        %p554 = pneg %p254
        %p555 = pneg %p251
        %s556 = sand.u32 %s39, 1
        %s557 = scalar_lea.sflag [#allocation8], %s556
        %s558 = sand.u32 %s267, 1
        %s559 = smul.addr %s558, 64
        %s560 = scalar_lea.vmem [#allocation7], %s559
        %p561 = pneg %p280
        %p562 = pneg %p277
        %p563 = pneg %p301
        %p564 = pneg %p298
        %p565 = pneg %p322
        %p566 = pneg %p319
        %p567 = pneg %p348
        %p568 = pneg %p345
        %s569 = sand.u32 %s335, 1
        %s570 = scalar_lea.sflag [#allocation6], %s569
        %s571 = sand.u32 %s335, 1
        %s572 = scalar_lea.vmem [#allocation10], %s571
        %p573 = pneg %p374
        %p574 = pneg %p371
        %s575 = sand.u32 %s39, 1
        %s576 = scalar_lea.sflag [#allocation12], %s575
        %s577 = sand.u32 %s361, 1
        %s578 = smul.addr %s577, 4
        %s579 = scalar_lea.vmem [#allocation11], %s578
        %p580 = pneg %p400
        %p581 = pneg %p397
        %s582 = sand.u32 %s39, 1
        %s583 = scalar_lea.sflag [#allocation12], %s582
        %s584 = sand.u32 %s387, 1
        %s585 = smul.addr %s584, 4
        %s586 = scalar_lea.vmem [#allocation13], %s585
        %p587 = scmp.lt.s32.totalorder %s39, 1
        %s588 = scalar_select %p587, %s39, 1
        %s589 = scalar_lea.vmem %s1, %s588
        %p590 = scmp.lt.s32.totalorder %s39, 1
        %s591 = scalar_select %p590, %s39, 1
        %s592 = smul.addr %s591, 16
        %s593 = smul.addr %s592, 8
        %s594 = scalar_lea.vmem %s10, %s593
        %s595 = sld [smem:[#allocation3]]
        %p596 = scmp.lt.s32.totalorder %s595, 0
        %s597 = ssub.s32 0, %s595
        %s598 = scalar_select %p596, %s597, %s595
        %s599 = sand.u32 %s598, 15
        %s600 = ssub.s32 0, %s599
        %s601 = scalar_select %p596, %s600, %s599
        %s602 = sadd.s32 %s595, 1
        %p603 = scmp.lt.s32.totalorder %s602, 16
        %s604 = scalar_select %p603, %s602, 16
        %v605 = vld [vmem:[%s589] sm:$0x1]
        %v606 = vld [vmem:[%s2] sm:$0xff]
        %v607 = vld [vmem:[%s2 + $0x8] sm:$0xff]
        %v608 = vld [vmem:[%s2 + $0x10] sm:$0xff]
        %v609 = vld [vmem:[%s2 + $0x18] sm:$0xff]
        %v610 = vld [vmem:[%s2 + $0x20] sm:$0xff]
        %v611 = vld [vmem:[%s2 + $0x28] sm:$0xff]
        %v612 = vld [vmem:[%s2 + $0x30] sm:$0xff]
        %v613 = vld [vmem:[%s2 + $0x38] sm:$0xff]
        %v614 = vld [vmem:[%s2 + $0x40] sm:$0xff]
        %v615 = vld [vmem:[%s2 + $0x48] sm:$0xff]
        %v616 = vld [vmem:[%s2 + $0x50] sm:$0xff]
        %v617 = vld [vmem:[%s2 + $0x58] sm:$0xff]
        %v618 = vld [vmem:[%s2 + $0x60] sm:$0xff]
        %v619 = vld [vmem:[%s2 + $0x68] sm:$0xff]
        %v620 = vld [vmem:[%s2 + $0x70] sm:$0xff]
        %v621 = vld [vmem:[%s2 + $0x78] sm:$0xff]
        %v622 = vld [vmem:[%s2 + $0x80] sm:$0xff]
        %v623 = vld [vmem:[%s2 + $0x88] sm:$0xff]
        %v624 = vld [vmem:[%s2 + $0x90] sm:$0xff]
        %v625 = vld [vmem:[%s2 + $0x98] sm:$0xff]
        %v626 = vld [vmem:[%s2 + $0xa0] sm:$0xff]
        %v627 = vld [vmem:[%s2 + $0xa8] sm:$0xff]
        %v628 = vld [vmem:[%s2 + $0xb0] sm:$0xff]
        %v629 = vld [vmem:[%s2 + $0xb8] sm:$0xff]
        %v630 = vld [vmem:[%s2 + $0xc0] sm:$0xff]
        %v631 = vld [vmem:[%s2 + $0xc8] sm:$0xff]
        %v632 = vld [vmem:[%s2 + $0xd0] sm:$0xff]
        %v633 = vld [vmem:[%s2 + $0xd8] sm:$0xff]
        %v634 = vld [vmem:[%s2 + $0xe0] sm:$0xff]
        %v635 = vld [vmem:[%s2 + $0xe8] sm:$0xff]
        %v636 = vld [vmem:[%s2 + $0xf0] sm:$0xff]
        %v637 = vld [vmem:[%s2 + $0xf8] sm:$0xff]
        %v638 = vld [vmem:[%s3] sm:$0x3]
        %v640 = vlaneseq
        %v641 = vshrl.u32 %v640, 7
        %v642 = vsub.s32 0, %v641
        %v643 = vrot.slane %v638, %v642
        %v644 = vlaneseq
        %v645 = vshrl.u32 %v644, 7
        %v646 = vsub.s32 1, %v645
        %v647 = vrot.slane %v638, %v646
        %650 = vmatprep.subr.mxu0 %v637
        %651 = vmatpush1.msra.mxu0 %v636
        %652 = vmatprep.subr.mxu0 %v635
        %653 = vmatpush1.msra.mxu0 %v634
        %654 = vmatprep.subr.mxu0 %v633
        %655 = vmatpush1.msra.mxu0 %v632
        %656 = vmatprep.subr.mxu0 %v631
        %657 = vmatpush1.msra.mxu0 %v630
        %658 = vmatprep.subr.mxu0 %v629
        %659 = vmatpush1.msra.mxu0 %v628
        %660 = vmatprep.subr.mxu0 %v627
        %661 = vmatpush1.msra.mxu0 %v626
        %662 = vmatprep.subr.mxu0 %v625
        %663 = vmatpush1.msra.mxu0 %v624
        %664 = vmatprep.subr.mxu0 %v623
        %665 = vmatpush1.msra.mxu0 %v622
        %666 = vmatprep.subr.mxu0 %v621
        %667 = vmatpush1.msra.mxu0 %v620
        %668 = vmatprep.subr.mxu0 %v619
        %669 = vmatpush1.msra.mxu0 %v618
        %670 = vmatprep.subr.mxu0 %v617
        %671 = vmatpush1.msra.mxu0 %v616
        %672 = vmatprep.subr.mxu0 %v615
        %673 = vmatpush1.msra.mxu0 %v614
        %674 = vmatprep.subr.mxu0 %v613
        %675 = vmatpush1.msra.mxu0 %v612
        %676 = vmatprep.subr.mxu0 %v611
        %677 = vmatpush1.msra.mxu0 %v610
        %678 = vmatprep.subr.mxu0 %v609
        %679 = vmatpush1.msra.mxu0 %v608
        %680 = vmatprep.subr.mxu0 %v607
        %681 = vmatpush1.msra.mxu0 %v606
        %682 = vmatprep.subr.mxu0 0.0
        %683 = vmatpush2.msra.mxu0 0.0
        %684 = vmatprep.subr.mxu0 0.0
        %685 = vmatpush2.msra.mxu0 0.0
        %686 = vmatprep.subr.mxu0 0.0
        %687 = vmatpush2.msra.mxu0 0.0
        %688 = vmatprep.subr.mxu0 0.0
        %689 = vmatpush2.msra.mxu0 0.0
        %690 = vmatprep.subr.mxu0 0.0
        %691 = vmatpush2.msra.mxu0 0.0
        %692 = vmatprep.subr.mxu0 0.0
        %693 = vmatpush2.msra.mxu0 0.0
        %694 = vmatprep.subr.mxu0 0.0
        %695 = vmatpush2.msra.mxu0 0.0
        %696 = vmatprep.subr.mxu0 0.0
        %697 = vmatpush2.msra.mxu0 0.0
        %698 = vmatprep.subr.mxu0 0.0
        %699 = vmatpush2.msra.mxu0 0.0
        %700 = vmatprep.subr.mxu0 0.0
        %701 = vmatpush2.msra.mxu0 0.0
        %702 = vmatprep.subr.mxu0 0.0
        %703 = vmatpush2.msra.mxu0 0.0
        %704 = vmatprep.subr.mxu0 0.0
        %705 = vmatpush2.msra.mxu0 0.0
        %706 = vmatprep.subr.mxu0 0.0
        %707 = vmatpush2.msra.mxu0 0.0
        %708 = vmatprep.subr.mxu0 0.0
        %709 = vmatpush2.msra.mxu0 0.0
        %710 = vmatprep.subr.mxu0 0.0
        %711 = vmatpush2.msra.mxu0 0.0
        %712 = vmatprep.subr.mxu0 0.0
        %713 = vmatpush2.msra.mxu0 0.0
        %714 = vmatprep.mubr.f32.mxu0 0.0
        %715 = vmatmul.mubr.f32.gmra.mxu0 %v605
        %v716 = vpop.f32.mrf.mxu0
        %v717 = vadd.f32 %v643, %v716
        %v718 = vpop.f32.mrf.mxu0
        %v719 = vadd.f32 %v647, %v718
        %720 = vdwg.mxu0
        %v721 = vld [vmem:[%s4] sm:$0xff]
        %v722 = vld [vmem:[%s4 + $0x8] sm:$0xff]
        %v723 = vld [vmem:[%s4 + $0x10] sm:$0xff]
        %v724 = vld [vmem:[%s4 + $0x18] sm:$0xff]
        %v725 = vld [vmem:[%s4 + $0x20] sm:$0xff]
        %v726 = vld [vmem:[%s4 + $0x28] sm:$0xff]
        %v727 = vld [vmem:[%s4 + $0x30] sm:$0xff]
        %v728 = vld [vmem:[%s4 + $0x38] sm:$0xff]
        %v729 = vld [vmem:[%s4 + $0x40] sm:$0xff]
        %v730 = vld [vmem:[%s4 + $0x48] sm:$0xff]
        %v731 = vld [vmem:[%s4 + $0x50] sm:$0xff]
        %v732 = vld [vmem:[%s4 + $0x58] sm:$0xff]
        %v733 = vld [vmem:[%s4 + $0x60] sm:$0xff]
        %v734 = vld [vmem:[%s4 + $0x68] sm:$0xff]
        %v735 = vld [vmem:[%s4 + $0x70] sm:$0xff]
        %v736 = vld [vmem:[%s4 + $0x78] sm:$0xff]
        %v737 = vld [vmem:[%s5] sm:$0x1]
        %738 = vmatprep.subr.mxu0 0.0
        %739 = vmatpush1.msra.mxu0 %v736
        %740 = vmatprep.subr.mxu0 0.0
        %741 = vmatpush1.msra.mxu0 %v735
        %742 = vmatprep.subr.mxu0 0.0
        %743 = vmatpush1.msra.mxu0 %v734
        %744 = vmatprep.subr.mxu0 0.0
        %745 = vmatpush1.msra.mxu0 %v733
        %746 = vmatprep.subr.mxu0 0.0
        %747 = vmatpush1.msra.mxu0 %v732
        %748 = vmatprep.subr.mxu0 0.0
        %749 = vmatpush1.msra.mxu0 %v731
        %750 = vmatprep.subr.mxu0 0.0
        %751 = vmatpush1.msra.mxu0 %v730
        %752 = vmatprep.subr.mxu0 0.0
        %753 = vmatpush1.msra.mxu0 %v729
        %754 = vmatprep.subr.mxu0 0.0
        %755 = vmatpush1.msra.mxu0 %v728
        %756 = vmatprep.subr.mxu0 0.0
        %757 = vmatpush1.msra.mxu0 %v727
        %758 = vmatprep.subr.mxu0 0.0
        %759 = vmatpush1.msra.mxu0 %v726
        %760 = vmatprep.subr.mxu0 0.0
        %761 = vmatpush1.msra.mxu0 %v725
        %762 = vmatprep.subr.mxu0 0.0
        %763 = vmatpush1.msra.mxu0 %v724
        %764 = vmatprep.subr.mxu0 0.0
        %765 = vmatpush1.msra.mxu0 %v723
        %766 = vmatprep.subr.mxu0 0.0
        %767 = vmatpush1.msra.mxu0 %v722
        %768 = vmatprep.subr.mxu0 0.0
        %769 = vmatpush1.msra.mxu0 %v721
        %770 = vmatprep.subr.mxu0 0.0
        %771 = vmatpush2.msra.mxu0 0.0
        %772 = vmatprep.subr.mxu0 0.0
        %773 = vmatpush2.msra.mxu0 0.0
        %774 = vmatprep.subr.mxu0 0.0
        %775 = vmatpush2.msra.mxu0 0.0
        %776 = vmatprep.subr.mxu0 0.0
        %777 = vmatpush2.msra.mxu0 0.0
        %778 = vmatprep.subr.mxu0 0.0
        %779 = vmatpush2.msra.mxu0 0.0
        %780 = vmatprep.subr.mxu0 0.0
        %781 = vmatpush2.msra.mxu0 0.0
        %782 = vmatprep.subr.mxu0 0.0
        %783 = vmatpush2.msra.mxu0 0.0
        %784 = vmatprep.subr.mxu0 0.0
        %785 = vmatpush2.msra.mxu0 0.0
        %786 = vmatprep.subr.mxu0 0.0
        %787 = vmatpush2.msra.mxu0 0.0
        %788 = vmatprep.subr.mxu0 0.0
        %789 = vmatpush2.msra.mxu0 0.0
        %790 = vmatprep.subr.mxu0 0.0
        %791 = vmatpush2.msra.mxu0 0.0
        %792 = vmatprep.subr.mxu0 0.0
        %793 = vmatpush2.msra.mxu0 0.0
        %794 = vmatprep.subr.mxu0 0.0
        %795 = vmatpush2.msra.mxu0 0.0
        %796 = vmatprep.subr.mxu0 0.0
        %797 = vmatpush2.msra.mxu0 0.0
        %798 = vmatprep.subr.mxu0 0.0
        %799 = vmatpush2.msra.mxu0 0.0
        %800 = vmatprep.subr.mxu0 0.0
        %801 = vmatpush2.msra.mxu0 0.0
        %802 = vmatprep.mubr.f32.mxu0 0.0
        %803 = vmatmul.mubr.f32.gmra.mxu0 %v605
        %v804 = vpop.f32.mrf.mxu0
        %v805 = vadd.f32 %v737, %v804
        %v806 = vpop.f32.mrf.mxu0
        %807 = vdwg.mxu0
        %v808 = vld [vmem:[#allocation4] sm:$0xff]
        %v809 = vld [vmem:[#allocation4 + $0x8] sm:$0xff]
        %v810 = vld [vmem:[#allocation4 + $0x10] sm:$0xff]
        %v811 = vld [vmem:[#allocation4 + $0x18] sm:$0xff]
        %v812 = vld [vmem:[#allocation4 + $0x20] sm:$0xff]
        %v813 = vld [vmem:[#allocation4 + $0x28] sm:$0xff]
        %v814 = vld [vmem:[#allocation4 + $0x30] sm:$0xff]
        %v815 = vld [vmem:[#allocation4 + $0x38] sm:$0xff]
        %v816 = vld [vmem:[#allocation4 + $0x40] sm:$0xff]
        %v817 = vld [vmem:[#allocation4 + $0x48] sm:$0xff]
        %v818 = vld [vmem:[#allocation4 + $0x50] sm:$0xff]
        %v819 = vld [vmem:[#allocation4 + $0x58] sm:$0xff]
        %v820 = vld [vmem:[#allocation4 + $0x60] sm:$0xff]
        %v821 = vld [vmem:[#allocation4 + $0x68] sm:$0xff]
        %v822 = vld [vmem:[#allocation4 + $0x70] sm:$0xff]
        %v823 = vld [vmem:[#allocation4 + $0x78] sm:$0xff]
        %v824 = vld [vmem:[%s7] sm:$0x1]
        %825 = vmatprep.subr.mxu0 0.0
        %826 = vmatpush1.msra.mxu0 %v823
        %827 = vmatprep.subr.mxu0 0.0
        %828 = vmatpush1.msra.mxu0 %v822
        %829 = vmatprep.subr.mxu0 0.0
        %830 = vmatpush1.msra.mxu0 %v821
        %831 = vmatprep.subr.mxu0 0.0
        %832 = vmatpush1.msra.mxu0 %v820
        %833 = vmatprep.subr.mxu0 0.0
        %834 = vmatpush1.msra.mxu0 %v819
        %835 = vmatprep.subr.mxu0 0.0
        %836 = vmatpush1.msra.mxu0 %v818
        %837 = vmatprep.subr.mxu0 0.0
        %838 = vmatpush1.msra.mxu0 %v817
        %839 = vmatprep.subr.mxu0 0.0
        %840 = vmatpush1.msra.mxu0 %v816
        %841 = vmatprep.subr.mxu0 0.0
        %842 = vmatpush1.msra.mxu0 %v815
        %843 = vmatprep.subr.mxu0 0.0
        %844 = vmatpush1.msra.mxu0 %v814
        %845 = vmatprep.subr.mxu0 0.0
        %846 = vmatpush1.msra.mxu0 %v813
        %847 = vmatprep.subr.mxu0 0.0
        %848 = vmatpush1.msra.mxu0 %v812
        %849 = vmatprep.subr.mxu0 0.0
        %850 = vmatpush1.msra.mxu0 %v811
        %851 = vmatprep.subr.mxu0 0.0
        %852 = vmatpush1.msra.mxu0 %v810
        %853 = vmatprep.subr.mxu0 0.0
        %854 = vmatpush1.msra.mxu0 %v809
        %855 = vmatprep.subr.mxu0 0.0
        %856 = vmatpush1.msra.mxu0 %v808
        %857 = vmatprep.subr.mxu0 0.0
        %858 = vmatpush2.msra.mxu0 0.0
        %859 = vmatprep.subr.mxu0 0.0
        %860 = vmatpush2.msra.mxu0 0.0
        %861 = vmatprep.subr.mxu0 0.0
        %862 = vmatpush2.msra.mxu0 0.0
        %863 = vmatprep.subr.mxu0 0.0
        %864 = vmatpush2.msra.mxu0 0.0
        %865 = vmatprep.subr.mxu0 0.0
        %866 = vmatpush2.msra.mxu0 0.0
        %867 = vmatprep.subr.mxu0 0.0
        %868 = vmatpush2.msra.mxu0 0.0
        %869 = vmatprep.subr.mxu0 0.0
        %870 = vmatpush2.msra.mxu0 0.0
        %871 = vmatprep.subr.mxu0 0.0
        %872 = vmatpush2.msra.mxu0 0.0
        %873 = vmatprep.subr.mxu0 0.0
        %874 = vmatpush2.msra.mxu0 0.0
        %875 = vmatprep.subr.mxu0 0.0
        %876 = vmatpush2.msra.mxu0 0.0
        %877 = vmatprep.subr.mxu0 0.0
        %878 = vmatpush2.msra.mxu0 0.0
        %879 = vmatprep.subr.mxu0 0.0
        %880 = vmatpush2.msra.mxu0 0.0
        %881 = vmatprep.subr.mxu0 0.0
        %882 = vmatpush2.msra.mxu0 0.0
        %883 = vmatprep.subr.mxu0 0.0
        %884 = vmatpush2.msra.mxu0 0.0
        %885 = vmatprep.subr.mxu0 0.0
        %886 = vmatpush2.msra.mxu0 0.0
        %887 = vmatprep.subr.mxu0 0.0
        %888 = vmatpush2.msra.mxu0 0.0
        %889 = vmatprep.mubr.f32.mxu0 0.0
        %890 = vmatmul.mubr.f32.gmra.mxu0 %v605
        %v891 = vpop.f32.mrf.mxu0
        %v892 = vadd.f32 %v824, %v891
        %v893 = vpop.f32.mrf.mxu0
        %894 = vdwg.mxu0
        %v895 = vld [vmem:[%s8] sm:$0x1]
        %v896 = vld [vmem:[%s9] sm:$0x1]
        %v898 = vrot.slane %v717, 7
        %899 = vrot.lane.b32.xlu0 %v898, 96
        %v900 = vpop.permute.xlu0 %899
        %v902 = vrot.slane %v717, 6
        %903 = vrot.lane.b32.xlu0 %v902, 64
        %v904 = vpop.permute.xlu0 %903
        %v906 = vrot.slane %v717, 5
        %907 = vrot.lane.b32.xlu0 %v906, 32
        %v908 = vpop.permute.xlu0 %907
        %v911 = vrot.slane %v719, 4
        %v913 = vrot.slane %v719, 3
        %914 = vrot.lane.b32.xlu0 %v913, 96
        %v915 = vpop.permute.xlu0 %914
        %v917 = vrot.slane %v719, 2
        %918 = vrot.lane.b32.xlu0 %v917, 64
        %v919 = vpop.permute.xlu0 %918
        %v921 = vrot.slane %v719, 1
        %922 = vrot.lane.b32.xlu0 %v921, 32
        %v923 = vpop.permute.xlu0 %922
        %vm925 = vcmask 1040384
        %v926 = vsel %vm925, %v717, %v900
        %vm927 = vcmask 1041408
        %v928 = vsel %vm927, %v926, %v904
        %vm929 = vcmask 1042432
        %v930 = vsel %vm929, %v928, %v908
        %vm931 = vcmask 1043456
        %v932 = vsel %vm931, %v930, %v911
        %vm933 = vcmask 1044480
        %v934 = vsel %vm933, %v932, %v915
        %vm935 = vcmask 1045504
        %v936 = vsel %vm935, %v934, %v919
        %vm937 = vcmask 1046528
        %v938 = vsel %vm937, %v936, %v923
        %v940 = vlaneseq
        %v941 = vshrl.u32 %v940, 7
        %v942 = vsub.s32 0, %v941
        %v943 = vrot.slane %v895, %v942
        %v945 = vmul.f32 %v938, %v943
        %v947 = vlaneseq
        %v948 = vshrl.u32 %v947, 7
        %v949 = vsub.s32 0, %v948
        %v950 = vrot.slane %v896, %v949
        %952 = vrot.lane.b32.xlu0 %v950, 16
        %v953 = vpop.permute.xlu0 %952
        %v955 = vmul.f32 %v938, %v953
        %957 = vrot.lane.b32.xlu0 %v955, 112
        %v958 = vpop.permute.xlu0 %957
        %v960 = vsub.f32 %v945, %v958
        %v961 = vmul.f32 %v938, %v950
        %962 = vrot.lane.b32.xlu0 %v943, 16
        %v963 = vpop.permute.xlu0 %962
        %v965 = vmul.f32 %v938, %v963
        %967 = vrot.lane.b32.xlu0 %v965, 112
        %v968 = vpop.permute.xlu0 %967
        %v970 = vadd.f32 %v961, %v968
        %972 = vrot.lane.b32.xlu0 %v970, 16
        %v973 = vpop.permute.xlu0 %972
        %vm975 = vcmask 130048
        %v976 = vsel %vm975, %v960, %v973
        %v978 = vrot.slane %v805, 7
        %979 = vrot.lane.b32.xlu0 %v978, 96
        %v980 = vpop.permute.xlu0 %979
        %v982 = vrot.slane %v805, 6
        %983 = vrot.lane.b32.xlu0 %v982, 64
        %v984 = vpop.permute.xlu0 %983
        %v986 = vrot.slane %v805, 5
        %987 = vrot.lane.b32.xlu0 %v986, 32
        %v988 = vpop.permute.xlu0 %987
        %v990 = vsel %vm925, %v805, %v980
        %v991 = vsel %vm927, %v990, %v984
        %v992 = vsel %vm929, %v991, %v988
        %v993 = vmul.f32 %v992, %v943
        %v994 = vmul.f32 %v992, %v953
        %996 = vrot.lane.b32.xlu0 %v994, 112
        %v997 = vpop.permute.xlu0 %996
        %v999 = vsub.f32 %v993, %v997
        %v1000 = vmul.f32 %v992, %v950
        %v1001 = vmul.f32 %v992, %v963
        %1003 = vrot.lane.b32.xlu0 %v1001, 112
        %v1004 = vpop.permute.xlu0 %1003
        %v1006 = vadd.f32 %v1000, %v1004
        %1008 = vrot.lane.b32.xlu0 %v1006, 16
        %v1009 = vpop.permute.xlu0 %1008
        %v1011 = vsel %vm975, %v999, %v1009
        %v1013 = vrot.slane %v892, 7
        %1014 = vrot.lane.b32.xlu0 %v1013, 96
        %v1015 = vpop.permute.xlu0 %1014
        %v1017 = vrot.slane %v892, 6
        %1018 = vrot.lane.b32.xlu0 %v1017, 64
        %v1019 = vpop.permute.xlu0 %1018
        %v1021 = vrot.slane %v892, 5
        %1022 = vrot.lane.b32.xlu0 %v1021, 32
        %v1023 = vpop.permute.xlu0 %1022
        %v1025 = vsel %vm925, %v892, %v1015
        %v1026 = vsel %vm927, %v1025, %v1019
        %v1027 = vsel %vm929, %v1026, %v1023
        %vm1028 = vcmask 257024
        %1029 = vst.msk [vmem:[%s579] sm:$0xf] %vm1028, %v1011
        %1030 = vst.msk [vmem:[%s586] sm:$0xf] %vm1028, %v1027
        %v1031 = vlaneseq
        %v1032 = vand.u32 %v1031, 127
        %v1033 = vstv %s601
        %vm1034 = vcmp.eq.s32.totalorder %v1032, %v1033
        %v1035 = vstv %s604
        %vm1036 = vcmp.lt.s32.totalorder %v1032, %v1035
        %v1037 = vld [vmem:[%s594] sm:$0xff]
        %v1038 = vld [vmem:[%s594 + $0x8] sm:$0xff]
        %v1039 = vld [vmem:[%s594 + $0x10] sm:$0xff]
        %v1040 = vld [vmem:[%s594 + $0x18] sm:$0xff]
        %vm1041 = vcmask 261120
        %v1043 = vsel %vm1041, %v976, 0
        %1045 = vmatprep.subr.mxu0 0.0
        %1046 = vmatpush1.msra.mxu0 0.0
        %1047 = vmatprep.subr.mxu0 0.0
        %1048 = vmatpush1.msra.mxu0 0.0
        %1049 = vmatprep.subr.mxu0 0.0
        %1050 = vmatpush1.msra.mxu0 0.0
        %1051 = vmatprep.subr.mxu0 0.0
        %1052 = vmatpush1.msra.mxu0 0.0
        %1053 = vmatprep.subr.mxu0 0.0
        %1054 = vmatpush1.msra.mxu0 0.0
        %1055 = vmatprep.subr.mxu0 0.0
        %1056 = vmatpush1.msra.mxu0 0.0
        %1057 = vmatprep.subr.mxu0 0.0
        %1058 = vmatpush1.msra.mxu0 0.0
        %1059 = vmatprep.subr.mxu0 0.0
        %1060 = vmatpush1.msra.mxu0 0.0
        %1061 = vmatprep.subr.mxu0 0.0
        %1062 = vmatpush1.msra.mxu0 0.0
        %1063 = vmatprep.subr.mxu0 0.0
        %1064 = vmatpush1.msra.mxu0 0.0
        %1065 = vmatprep.subr.mxu0 0.0
        %1066 = vmatpush1.msra.mxu0 0.0
        %1067 = vmatprep.subr.mxu0 0.0
        %1068 = vmatpush1.msra.mxu0 0.0
        %1069 = vmatprep.subr.mxu0 0.0
        %1070 = vmatpush1.msra.mxu0 %v1040
        %1071 = vmatprep.subr.mxu0 0.0
        %1072 = vmatpush1.msra.mxu0 %v1039
        %1073 = vmatprep.subr.mxu0 0.0
        %1074 = vmatpush1.msra.mxu0 %v1038
        %1075 = vmatprep.subr.mxu0 0.0
        %1076 = vmatpush1.msra.mxu0 %v1037
        %1077 = vmatprep.subr.mxu0 0.0
        %1078 = vmatpush2.msra.mxu0 0.0
        %1079 = vmatprep.subr.mxu0 0.0
        %1080 = vmatpush2.msra.mxu0 0.0
        %1081 = vmatprep.subr.mxu0 0.0
        %1082 = vmatpush2.msra.mxu0 0.0
        %1083 = vmatprep.subr.mxu0 0.0
        %1084 = vmatpush2.msra.mxu0 0.0
        %1085 = vmatprep.subr.mxu0 0.0
        %1086 = vmatpush2.msra.mxu0 0.0
        %1087 = vmatprep.subr.mxu0 0.0
        %1088 = vmatpush2.msra.mxu0 0.0
        %1089 = vmatprep.subr.mxu0 0.0
        %1090 = vmatpush2.msra.mxu0 0.0
        %1091 = vmatprep.subr.mxu0 0.0
        %1092 = vmatpush2.msra.mxu0 0.0
        %1093 = vmatprep.subr.mxu0 0.0
        %1094 = vmatpush2.msra.mxu0 0.0
        %1095 = vmatprep.subr.mxu0 0.0
        %1096 = vmatpush2.msra.mxu0 0.0
        %1097 = vmatprep.subr.mxu0 0.0
        %1098 = vmatpush2.msra.mxu0 0.0
        %1099 = vmatprep.subr.mxu0 0.0
        %1100 = vmatpush2.msra.mxu0 0.0
        %1101 = vmatprep.subr.mxu0 0.0
        %1102 = vmatpush2.msra.mxu0 0.0
        %1103 = vmatprep.subr.mxu0 0.0
        %1104 = vmatpush2.msra.mxu0 0.0
        %1105 = vmatprep.subr.mxu0 0.0
        %1106 = vmatpush2.msra.mxu0 0.0
        %1107 = vmatprep.subr.mxu0 0.0
        %1108 = vmatpush2.msra.mxu0 0.0
        %1109 = vmatprep.mubr.f32.mxu0 0.0
        %1110 = vmatmul.mubr.f32.gmra.mxu0 %v1043
        %v1111 = vpop.f32.mrf.mxu0
        %v1112 = vadd.f32 0.0, %v1111
        %v1113 = vpop.f32.mrf.mxu0
        %1114 = vdwg.mxu0
        %v1115 = vmul.f32 %v1112, 0.17677669
        %v1116 = vlaneseq
        %v1117 = vshrl.u32 %v1116, 7
        %v1118 = vsub.s32 0, %v1117
        %v1119 = vrot.slane %v1011, %v1118
        %v1120 = vmul.f32 %v976, %v1119
        %vm1121 = vcmask 254976
        %v1122 = vsel %vm1121, %v1120, 0.0
        %1123 = vadd.xlane.f32.xlu0 %v1122
        %v1124 = vpop.xlane.xlu0 %1123
        %v1125 = vmul.f32 %v1124, 0.17677669
        %v1126 = vsel %vm1034, 1, 0
        %vm1127 = vcmp.eq.s32.totalorder %v1126, 1
        %v1128 = vsel %vm1127, %v1125, %v1115
        %v1129 = vsel %vm1036, 1, 0
        %vm1130 = vcmp.eq.s32.totalorder %v1129, 1
        %v1131 = vsel %vm1130, %v1128, -1e+30
        %vm1132 = vcmask 123904
        %v1133 = vsel %vm1132, %v1131, -inf
        %1134 = vmax.xlane.f32.xlu0 %v1133
        %v1135 = vpop.xlane.xlu0 %1134
        %v1136 = vsub.f32 %v1131, %v1135
        %v1137 = vmul.f32 %v1136, 1.442695
        %v1138 = vpow.pop %v1137
        %v1139 = vsel %vm1132, %v1138, 0.0
        %1140 = vadd.xlane.f32.xlu0 %v1139
        %v1141 = vpop.xlane.xlu0 %1140
        %v1142 = vrcp.pop %v1141
        %v1143 = vmul.f32 %v1138, %v1142
        %v1144 = vsel %vm1127, %v1143, 0.0
        %v1145 = vsel %vm1132, %v1144, 0.0
        %1146 = vadd.xlane.f32.xlu0 %v1145
        %v1147 = vpop.xlane.xlu0 %1146
        %v1148 = vsel %vm1127, 0.0, %v1143
        %v1149 = vld [vmem:[%s519] sm:$0xff]
        %v1150 = vld [vmem:[%s519 + $0x8] sm:$0xff]
        %v1151 = vlaneseq
        %v1152 = vshrl.u32 %v1151, 7
        %v1153 = vsub.s32 0, %v1152
        %v1154 = vrot.slane %v1027, %v1153
        %v1155 = vmul.f32 %v1147, %v1154
        %v1157 = vsel %vm975, %v1148, 0
        %1159 = vmatprep.subr.mxu0 0.0
        %1160 = vmatpush1.msra.mxu0 0.0
        %1161 = vmatprep.subr.mxu0 0.0
        %1162 = vmatpush1.msra.mxu0 0.0
        %1163 = vmatprep.subr.mxu0 0.0
        %1164 = vmatpush1.msra.mxu0 0.0
        %1165 = vmatprep.subr.mxu0 0.0
        %1166 = vmatpush1.msra.mxu0 0.0
        %1167 = vmatprep.subr.mxu0 0.0
        %1168 = vmatpush1.msra.mxu0 0.0
        %1169 = vmatprep.subr.mxu0 0.0
        %1170 = vmatpush1.msra.mxu0 0.0
        %1171 = vmatprep.subr.mxu0 0.0
        %1172 = vmatpush1.msra.mxu0 0.0
        %1173 = vmatprep.subr.mxu0 0.0
        %1174 = vmatpush1.msra.mxu0 0.0
        %1175 = vmatprep.subr.mxu0 0.0
        %1176 = vmatpush1.msra.mxu0 0.0
        %1177 = vmatprep.subr.mxu0 0.0
        %1178 = vmatpush1.msra.mxu0 0.0
        %1179 = vmatprep.subr.mxu0 0.0
        %1180 = vmatpush1.msra.mxu0 0.0
        %1181 = vmatprep.subr.mxu0 0.0
        %1182 = vmatpush1.msra.mxu0 0.0
        %1183 = vmatprep.subr.mxu0 0.0
        %1184 = vmatpush1.msra.mxu0 0.0
        %1185 = vmatprep.subr.mxu0 0.0
        %1186 = vmatpush1.msra.mxu0 0.0
        %1187 = vmatprep.subr.mxu0 0.0
        %1188 = vmatpush1.msra.mxu0 %v1150
        %1189 = vmatprep.subr.mxu0 0.0
        %1190 = vmatpush1.msra.mxu0 %v1149
        %1191 = vmatprep.subr.mxu0 0.0
        %1192 = vmatpush2.msra.mxu0 0.0
        %1193 = vmatprep.subr.mxu0 0.0
        %1194 = vmatpush2.msra.mxu0 0.0
        %1195 = vmatprep.subr.mxu0 0.0
        %1196 = vmatpush2.msra.mxu0 0.0
        %1197 = vmatprep.subr.mxu0 0.0
        %1198 = vmatpush2.msra.mxu0 0.0
        %1199 = vmatprep.subr.mxu0 0.0
        %1200 = vmatpush2.msra.mxu0 0.0
        %1201 = vmatprep.subr.mxu0 0.0
        %1202 = vmatpush2.msra.mxu0 0.0
        %1203 = vmatprep.subr.mxu0 0.0
        %1204 = vmatpush2.msra.mxu0 0.0
        %1205 = vmatprep.subr.mxu0 0.0
        %1206 = vmatpush2.msra.mxu0 0.0
        %1207 = vmatprep.subr.mxu0 0.0
        %1208 = vmatpush2.msra.mxu0 0.0
        %1209 = vmatprep.subr.mxu0 0.0
        %1210 = vmatpush2.msra.mxu0 0.0
        %1211 = vmatprep.subr.mxu0 0.0
        %1212 = vmatpush2.msra.mxu0 0.0
        %1213 = vmatprep.subr.mxu0 0.0
        %1214 = vmatpush2.msra.mxu0 0.0
        %1215 = vmatprep.subr.mxu0 0.0
        %1216 = vmatpush2.msra.mxu0 0.0
        %1217 = vmatprep.subr.mxu0 0.0
        %1218 = vmatpush2.msra.mxu0 0.0
        %1219 = vmatprep.subr.mxu0 0.0
        %1220 = vmatpush2.msra.mxu0 0.0
        %1221 = vmatprep.subr.mxu0 0.0
        %1222 = vmatpush2.msra.mxu0 0.0
        %1223 = vmatprep.mubr.f32.mxu0 0.0
        %1224 = vmatmul.mubr.f32.gmra.mxu0 %v1157
        %v1225 = vpop.f32.mrf.mxu0
        %v1226 = vadd.f32 %v1155, %v1225
        %v1227 = vpop.f32.mrf.mxu0
        %1228 = vdwg.mxu0
        %s1229 = scalar_lea.vmem %s594, 32
        %v1230 = vld [vmem:[%s1229] sm:$0xff]
        %v1231 = vld [vmem:[%s1229 + $0x8] sm:$0xff]
        %v1232 = vld [vmem:[%s1229 + $0x10] sm:$0xff]
        %v1233 = vld [vmem:[%s1229 + $0x18] sm:$0xff]
        %v1234 = vrot.slane %v976, 2
        %v1235 = vsel %vm1041, %v1234, 0
        %1237 = vmatprep.subr.mxu0 0.0
        %1238 = vmatpush1.msra.mxu0 0.0
        %1239 = vmatprep.subr.mxu0 0.0
        %1240 = vmatpush1.msra.mxu0 0.0
        %1241 = vmatprep.subr.mxu0 0.0
        %1242 = vmatpush1.msra.mxu0 0.0
        %1243 = vmatprep.subr.mxu0 0.0
        %1244 = vmatpush1.msra.mxu0 0.0
        %1245 = vmatprep.subr.mxu0 0.0
        %1246 = vmatpush1.msra.mxu0 0.0
        %1247 = vmatprep.subr.mxu0 0.0
        %1248 = vmatpush1.msra.mxu0 0.0
        %1249 = vmatprep.subr.mxu0 0.0
        %1250 = vmatpush1.msra.mxu0 0.0
        %1251 = vmatprep.subr.mxu0 0.0
        %1252 = vmatpush1.msra.mxu0 0.0
        %1253 = vmatprep.subr.mxu0 0.0
        %1254 = vmatpush1.msra.mxu0 0.0
        %1255 = vmatprep.subr.mxu0 0.0
        %1256 = vmatpush1.msra.mxu0 0.0
        %1257 = vmatprep.subr.mxu0 0.0
        %1258 = vmatpush1.msra.mxu0 0.0
        %1259 = vmatprep.subr.mxu0 0.0
        %1260 = vmatpush1.msra.mxu0 0.0
        %1261 = vmatprep.subr.mxu0 0.0
        %1262 = vmatpush1.msra.mxu0 %v1233
        %1263 = vmatprep.subr.mxu0 0.0
        %1264 = vmatpush1.msra.mxu0 %v1232
        %1265 = vmatprep.subr.mxu0 0.0
        %1266 = vmatpush1.msra.mxu0 %v1231
        %1267 = vmatprep.subr.mxu0 0.0
        %1268 = vmatpush1.msra.mxu0 %v1230
        %1269 = vmatprep.subr.mxu0 0.0
        %1270 = vmatpush2.msra.mxu0 0.0
        %1271 = vmatprep.subr.mxu0 0.0
        %1272 = vmatpush2.msra.mxu0 0.0
        %1273 = vmatprep.subr.mxu0 0.0
        %1274 = vmatpush2.msra.mxu0 0.0
        %1275 = vmatprep.subr.mxu0 0.0
        %1276 = vmatpush2.msra.mxu0 0.0
        %1277 = vmatprep.subr.mxu0 0.0
        %1278 = vmatpush2.msra.mxu0 0.0
        %1279 = vmatprep.subr.mxu0 0.0
        %1280 = vmatpush2.msra.mxu0 0.0
        %1281 = vmatprep.subr.mxu0 0.0
        %1282 = vmatpush2.msra.mxu0 0.0
        %1283 = vmatprep.subr.mxu0 0.0
        %1284 = vmatpush2.msra.mxu0 0.0
        %1285 = vmatprep.subr.mxu0 0.0
        %1286 = vmatpush2.msra.mxu0 0.0
        %1287 = vmatprep.subr.mxu0 0.0
        %1288 = vmatpush2.msra.mxu0 0.0
        %1289 = vmatprep.subr.mxu0 0.0
        %1290 = vmatpush2.msra.mxu0 0.0
        %1291 = vmatprep.subr.mxu0 0.0
        %1292 = vmatpush2.msra.mxu0 0.0
        %1293 = vmatprep.subr.mxu0 0.0
        %1294 = vmatpush2.msra.mxu0 0.0
        %1295 = vmatprep.subr.mxu0 0.0
        %1296 = vmatpush2.msra.mxu0 0.0
        %1297 = vmatprep.subr.mxu0 0.0
        %1298 = vmatpush2.msra.mxu0 0.0
        %1299 = vmatprep.subr.mxu0 0.0
        %1300 = vmatpush2.msra.mxu0 0.0
        %1301 = vmatprep.mubr.f32.mxu0 0.0
        %1302 = vmatmul.mubr.f32.gmra.mxu0 %v1235
        %v1303 = vpop.f32.mrf.mxu0
        %v1304 = vadd.f32 0.0, %v1303
        %v1305 = vpop.f32.mrf.mxu0
        %1306 = vdwg.mxu0
        %v1307 = vmul.f32 %v1304, 0.17677669
        %v1308 = vlaneseq
        %v1309 = vshrl.u32 %v1308, 7
        %v1310 = vsub.s32 1, %v1309
        %v1311 = vrot.slane %v1011, %v1310
        %v1312 = vmul.f32 %v976, %v1311
        %vm1313 = vcmask 257026
        %v1314 = vsel %vm1313, %v1312, 0.0
        %1315 = vadd.xlane.f32.xlu0 %v1314
        %v1316 = vpop.xlane.xlu0 %1315
        %v1317 = vmul.f32 %v1316, 0.17677669
        %v1319 = vrot.slane %v1307, 6
        %v1321 = vsel %vm1127, %v1317, %v1319
        %v1322 = vsel %vm1130, %v1321, -1e+30
        %vm1323 = vcmask 125954
        %v1324 = vsel %vm1323, %v1322, -inf
        %1325 = vmax.xlane.f32.xlu0 %v1324
        %v1326 = vpop.xlane.xlu0 %1325
        %v1327 = vsub.f32 %v1322, %v1326
        %v1328 = vmul.f32 %v1327, 1.442695
        %v1329 = vpow.pop %v1328
        %v1330 = vsel %vm1323, %v1329, 0.0
        %1331 = vadd.xlane.f32.xlu0 %v1330
        %v1332 = vpop.xlane.xlu0 %1331
        %v1333 = vrcp.pop %v1332
        %v1334 = vmul.f32 %v1329, %v1333
        %v1335 = vsel %vm1127, %v1334, 0.0
        %v1336 = vsel %vm1323, %v1335, 0.0
        %1337 = vadd.xlane.f32.xlu0 %v1336
        %v1338 = vpop.xlane.xlu0 %1337
        %v1339 = vsel %vm1127, 0.0, %v1334
        %s1340 = scalar_lea.vmem %s519, 16 [#allocation7]
        %v1341 = vld [vmem:[%s1340] sm:$0xff]
        %v1342 = vld [vmem:[%s1340 + $0x8] sm:$0xff]
        %v1343 = vlaneseq
        %v1344 = vshrl.u32 %v1343, 7
        %v1345 = vsub.s32 1, %v1344
        %v1346 = vrot.slane %v1027, %v1345
        %v1347 = vmul.f32 %v1338, %v1346
        %v1349 = vrot.slane %v1339, 2
        %v1351 = vrot.slane %v1347, 2
        %v1353 = vsel %vm975, %v1349, 0
        %1355 = vmatprep.subr.mxu0 0.0
        %1356 = vmatpush1.msra.mxu0 0.0
        %1357 = vmatprep.subr.mxu0 0.0
        %1358 = vmatpush1.msra.mxu0 0.0
        %1359 = vmatprep.subr.mxu0 0.0
        %1360 = vmatpush1.msra.mxu0 0.0
        %1361 = vmatprep.subr.mxu0 0.0
        %1362 = vmatpush1.msra.mxu0 0.0
        %1363 = vmatprep.subr.mxu0 0.0
        %1364 = vmatpush1.msra.mxu0 0.0
        %1365 = vmatprep.subr.mxu0 0.0
        %1366 = vmatpush1.msra.mxu0 0.0
        %1367 = vmatprep.subr.mxu0 0.0
        %1368 = vmatpush1.msra.mxu0 0.0
        %1369 = vmatprep.subr.mxu0 0.0
        %1370 = vmatpush1.msra.mxu0 0.0
        %1371 = vmatprep.subr.mxu0 0.0
        %1372 = vmatpush1.msra.mxu0 0.0
        %1373 = vmatprep.subr.mxu0 0.0
        %1374 = vmatpush1.msra.mxu0 0.0
        %1375 = vmatprep.subr.mxu0 0.0
        %1376 = vmatpush1.msra.mxu0 0.0
        %1377 = vmatprep.subr.mxu0 0.0
        %1378 = vmatpush1.msra.mxu0 0.0
        %1379 = vmatprep.subr.mxu0 0.0
        %1380 = vmatpush1.msra.mxu0 0.0
        %1381 = vmatprep.subr.mxu0 0.0
        %1382 = vmatpush1.msra.mxu0 0.0
        %1383 = vmatprep.subr.mxu0 0.0
        %1384 = vmatpush1.msra.mxu0 %v1342
        %1385 = vmatprep.subr.mxu0 0.0
        %1386 = vmatpush1.msra.mxu0 %v1341
        %1387 = vmatprep.subr.mxu0 0.0
        %1388 = vmatpush2.msra.mxu0 0.0
        %1389 = vmatprep.subr.mxu0 0.0
        %1390 = vmatpush2.msra.mxu0 0.0
        %1391 = vmatprep.subr.mxu0 0.0
        %1392 = vmatpush2.msra.mxu0 0.0
        %1393 = vmatprep.subr.mxu0 0.0
        %1394 = vmatpush2.msra.mxu0 0.0
        %1395 = vmatprep.subr.mxu0 0.0
        %1396 = vmatpush2.msra.mxu0 0.0
        %1397 = vmatprep.subr.mxu0 0.0
        %1398 = vmatpush2.msra.mxu0 0.0
        %1399 = vmatprep.subr.mxu0 0.0
        %1400 = vmatpush2.msra.mxu0 0.0
        %1401 = vmatprep.subr.mxu0 0.0
        %1402 = vmatpush2.msra.mxu0 0.0
        %1403 = vmatprep.subr.mxu0 0.0
        %1404 = vmatpush2.msra.mxu0 0.0
        %1405 = vmatprep.subr.mxu0 0.0
        %1406 = vmatpush2.msra.mxu0 0.0
        %1407 = vmatprep.subr.mxu0 0.0
        %1408 = vmatpush2.msra.mxu0 0.0
        %1409 = vmatprep.subr.mxu0 0.0
        %1410 = vmatpush2.msra.mxu0 0.0
        %1411 = vmatprep.subr.mxu0 0.0
        %1412 = vmatpush2.msra.mxu0 0.0
        %1413 = vmatprep.subr.mxu0 0.0
        %1414 = vmatpush2.msra.mxu0 0.0
        %1415 = vmatprep.subr.mxu0 0.0
        %1416 = vmatpush2.msra.mxu0 0.0
        %1417 = vmatprep.subr.mxu0 0.0
        %1418 = vmatpush2.msra.mxu0 0.0
        %1419 = vmatprep.mubr.f32.mxu0 0.0
        %1420 = vmatmul.mubr.f32.gmra.mxu0 %v1353
        %v1421 = vpop.f32.mrf.mxu0
        %v1422 = vadd.f32 %v1351, %v1421
        %v1423 = vpop.f32.mrf.mxu0
        %1424 = vdwg.mxu0
        %s1425 = scalar_lea.vmem %s594, 64
        %v1426 = vld [vmem:[%s1425] sm:$0xff]
        %v1427 = vld [vmem:[%s1425 + $0x8] sm:$0xff]
        %v1428 = vld [vmem:[%s1425 + $0x10] sm:$0xff]
        %v1429 = vld [vmem:[%s1425 + $0x18] sm:$0xff]
        %v1430 = vrot.slane %v976, 4
        %v1431 = vsel %vm1041, %v1430, 0
        %1433 = vmatprep.subr.mxu0 0.0
        %1434 = vmatpush1.msra.mxu0 0.0
        %1435 = vmatprep.subr.mxu0 0.0
        %1436 = vmatpush1.msra.mxu0 0.0
        %1437 = vmatprep.subr.mxu0 0.0
        %1438 = vmatpush1.msra.mxu0 0.0
        %1439 = vmatprep.subr.mxu0 0.0
        %1440 = vmatpush1.msra.mxu0 0.0
        %1441 = vmatprep.subr.mxu0 0.0
        %1442 = vmatpush1.msra.mxu0 0.0
        %1443 = vmatprep.subr.mxu0 0.0
        %1444 = vmatpush1.msra.mxu0 0.0
        %1445 = vmatprep.subr.mxu0 0.0
        %1446 = vmatpush1.msra.mxu0 0.0
        %1447 = vmatprep.subr.mxu0 0.0
        %1448 = vmatpush1.msra.mxu0 0.0
        %1449 = vmatprep.subr.mxu0 0.0
        %1450 = vmatpush1.msra.mxu0 0.0
        %1451 = vmatprep.subr.mxu0 0.0
        %1452 = vmatpush1.msra.mxu0 0.0
        %1453 = vmatprep.subr.mxu0 0.0
        %1454 = vmatpush1.msra.mxu0 0.0
        %1455 = vmatprep.subr.mxu0 0.0
        %1456 = vmatpush1.msra.mxu0 0.0
        %1457 = vmatprep.subr.mxu0 0.0
        %1458 = vmatpush1.msra.mxu0 %v1429
        %1459 = vmatprep.subr.mxu0 0.0
        %1460 = vmatpush1.msra.mxu0 %v1428
        %1461 = vmatprep.subr.mxu0 0.0
        %1462 = vmatpush1.msra.mxu0 %v1427
        %1463 = vmatprep.subr.mxu0 0.0
        %1464 = vmatpush1.msra.mxu0 %v1426
        %1465 = vmatprep.subr.mxu0 0.0
        %1466 = vmatpush2.msra.mxu0 0.0
        %1467 = vmatprep.subr.mxu0 0.0
        %1468 = vmatpush2.msra.mxu0 0.0
        %1469 = vmatprep.subr.mxu0 0.0
        %1470 = vmatpush2.msra.mxu0 0.0
        %1471 = vmatprep.subr.mxu0 0.0
        %1472 = vmatpush2.msra.mxu0 0.0
        %1473 = vmatprep.subr.mxu0 0.0
        %1474 = vmatpush2.msra.mxu0 0.0
        %1475 = vmatprep.subr.mxu0 0.0
        %1476 = vmatpush2.msra.mxu0 0.0
        %1477 = vmatprep.subr.mxu0 0.0
        %1478 = vmatpush2.msra.mxu0 0.0
        %1479 = vmatprep.subr.mxu0 0.0
        %1480 = vmatpush2.msra.mxu0 0.0
        %1481 = vmatprep.subr.mxu0 0.0
        %1482 = vmatpush2.msra.mxu0 0.0
        %1483 = vmatprep.subr.mxu0 0.0
        %1484 = vmatpush2.msra.mxu0 0.0
        %1485 = vmatprep.subr.mxu0 0.0
        %1486 = vmatpush2.msra.mxu0 0.0
        %1487 = vmatprep.subr.mxu0 0.0
        %1488 = vmatpush2.msra.mxu0 0.0
        %1489 = vmatprep.subr.mxu0 0.0
        %1490 = vmatpush2.msra.mxu0 0.0
        %1491 = vmatprep.subr.mxu0 0.0
        %1492 = vmatpush2.msra.mxu0 0.0
        %1493 = vmatprep.subr.mxu0 0.0
        %1494 = vmatpush2.msra.mxu0 0.0
        %1495 = vmatprep.subr.mxu0 0.0
        %1496 = vmatpush2.msra.mxu0 0.0
        %1497 = vmatprep.mubr.f32.mxu0 0.0
        %1498 = vmatmul.mubr.f32.gmra.mxu0 %v1431
        %v1499 = vpop.f32.mrf.mxu0
        %v1500 = vadd.f32 0.0, %v1499
        %v1501 = vpop.f32.mrf.mxu0
        %1502 = vdwg.mxu0
        %v1503 = vmul.f32 %v1500, 0.17677669
        %v1504 = vlaneseq
        %v1505 = vshrl.u32 %v1504, 7
        %v1506 = vsub.s32 2, %v1505
        %v1507 = vrot.slane %v1011, %v1506
        %v1508 = vmul.f32 %v976, %v1507
        %vm1509 = vcmask 259076
        %v1510 = vsel %vm1509, %v1508, 0.0
        %1511 = vadd.xlane.f32.xlu0 %v1510
        %v1512 = vpop.xlane.xlu0 %1511
        %v1513 = vmul.f32 %v1512, 0.17677669
        %v1515 = vrot.slane %v1503, 4
        %v1517 = vsel %vm1127, %v1513, %v1515
        %v1518 = vsel %vm1130, %v1517, -1e+30
        %vm1519 = vcmask 128004
        %v1520 = vsel %vm1519, %v1518, -inf
        %1521 = vmax.xlane.f32.xlu0 %v1520
        %v1522 = vpop.xlane.xlu0 %1521
        %v1523 = vsub.f32 %v1518, %v1522
        %v1524 = vmul.f32 %v1523, 1.442695
        %v1525 = vpow.pop %v1524
        %v1526 = vsel %vm1519, %v1525, 0.0
        %1527 = vadd.xlane.f32.xlu0 %v1526
        %v1528 = vpop.xlane.xlu0 %1527
        %v1529 = vrcp.pop %v1528
        %v1530 = vmul.f32 %v1525, %v1529
        %v1531 = vsel %vm1127, %v1530, 0.0
        %v1532 = vsel %vm1519, %v1531, 0.0
        %1533 = vadd.xlane.f32.xlu0 %v1532
        %v1534 = vpop.xlane.xlu0 %1533
        %v1535 = vsel %vm1127, 0.0, %v1530
        %s1536 = scalar_lea.vmem %s519, 32 [#allocation7]
        %v1537 = vld [vmem:[%s1536] sm:$0xff]
        %v1538 = vld [vmem:[%s1536 + $0x8] sm:$0xff]
        %v1539 = vlaneseq
        %v1540 = vshrl.u32 %v1539, 7
        %v1541 = vsub.s32 2, %v1540
        %v1542 = vrot.slane %v1027, %v1541
        %v1543 = vmul.f32 %v1534, %v1542
        %v1545 = vrot.slane %v1535, 4
        %v1547 = vrot.slane %v1543, 4
        %v1549 = vsel %vm975, %v1545, 0
        %1551 = vmatprep.subr.mxu0 0.0
        %1552 = vmatpush1.msra.mxu0 0.0
        %1553 = vmatprep.subr.mxu0 0.0
        %1554 = vmatpush1.msra.mxu0 0.0
        %1555 = vmatprep.subr.mxu0 0.0
        %1556 = vmatpush1.msra.mxu0 0.0
        %1557 = vmatprep.subr.mxu0 0.0
        %1558 = vmatpush1.msra.mxu0 0.0
        %1559 = vmatprep.subr.mxu0 0.0
        %1560 = vmatpush1.msra.mxu0 0.0
        %1561 = vmatprep.subr.mxu0 0.0
        %1562 = vmatpush1.msra.mxu0 0.0
        %1563 = vmatprep.subr.mxu0 0.0
        %1564 = vmatpush1.msra.mxu0 0.0
        %1565 = vmatprep.subr.mxu0 0.0
        %1566 = vmatpush1.msra.mxu0 0.0
        %1567 = vmatprep.subr.mxu0 0.0
        %1568 = vmatpush1.msra.mxu0 0.0
        %1569 = vmatprep.subr.mxu0 0.0
        %1570 = vmatpush1.msra.mxu0 0.0
        %1571 = vmatprep.subr.mxu0 0.0
        %1572 = vmatpush1.msra.mxu0 0.0
        %1573 = vmatprep.subr.mxu0 0.0
        %1574 = vmatpush1.msra.mxu0 0.0
        %1575 = vmatprep.subr.mxu0 0.0
        %1576 = vmatpush1.msra.mxu0 0.0
        %1577 = vmatprep.subr.mxu0 0.0
        %1578 = vmatpush1.msra.mxu0 0.0
        %1579 = vmatprep.subr.mxu0 0.0
        %1580 = vmatpush1.msra.mxu0 %v1538
        %1581 = vmatprep.subr.mxu0 0.0
        %1582 = vmatpush1.msra.mxu0 %v1537
        %1583 = vmatprep.subr.mxu0 0.0
        %1584 = vmatpush2.msra.mxu0 0.0
        %1585 = vmatprep.subr.mxu0 0.0
        %1586 = vmatpush2.msra.mxu0 0.0
        %1587 = vmatprep.subr.mxu0 0.0
        %1588 = vmatpush2.msra.mxu0 0.0
        %1589 = vmatprep.subr.mxu0 0.0
        %1590 = vmatpush2.msra.mxu0 0.0
        %1591 = vmatprep.subr.mxu0 0.0
        %1592 = vmatpush2.msra.mxu0 0.0
        %1593 = vmatprep.subr.mxu0 0.0
        %1594 = vmatpush2.msra.mxu0 0.0
        %1595 = vmatprep.subr.mxu0 0.0
        %1596 = vmatpush2.msra.mxu0 0.0
        %1597 = vmatprep.subr.mxu0 0.0
        %1598 = vmatpush2.msra.mxu0 0.0
        %1599 = vmatprep.subr.mxu0 0.0
        %1600 = vmatpush2.msra.mxu0 0.0
        %1601 = vmatprep.subr.mxu0 0.0
        %1602 = vmatpush2.msra.mxu0 0.0
        %1603 = vmatprep.subr.mxu0 0.0
        %1604 = vmatpush2.msra.mxu0 0.0
        %1605 = vmatprep.subr.mxu0 0.0
        %1606 = vmatpush2.msra.mxu0 0.0
        %1607 = vmatprep.subr.mxu0 0.0
        %1608 = vmatpush2.msra.mxu0 0.0
        %1609 = vmatprep.subr.mxu0 0.0
        %1610 = vmatpush2.msra.mxu0 0.0
        %1611 = vmatprep.subr.mxu0 0.0
        %1612 = vmatpush2.msra.mxu0 0.0
        %1613 = vmatprep.subr.mxu0 0.0
        %1614 = vmatpush2.msra.mxu0 0.0
        %1615 = vmatprep.mubr.f32.mxu0 0.0
        %1616 = vmatmul.mubr.f32.gmra.mxu0 %v1549
        %v1617 = vpop.f32.mrf.mxu0
        %v1618 = vadd.f32 %v1547, %v1617
        %v1619 = vpop.f32.mrf.mxu0
        %1620 = vdwg.mxu0
        %s1621 = scalar_lea.vmem %s594, 96
        %v1622 = vld [vmem:[%s1621] sm:$0xff]
        %v1623 = vld [vmem:[%s1621 + $0x8] sm:$0xff]
        %v1624 = vld [vmem:[%s1621 + $0x10] sm:$0xff]
        %v1625 = vld [vmem:[%s1621 + $0x18] sm:$0xff]
        %v1626 = vrot.slane %v976, 6
        %v1627 = vsel %vm1041, %v1626, 0
        %1629 = vmatprep.subr.mxu0 0.0
        %1630 = vmatpush1.msra.mxu0 0.0
        %1631 = vmatprep.subr.mxu0 0.0
        %1632 = vmatpush1.msra.mxu0 0.0
        %1633 = vmatprep.subr.mxu0 0.0
        %1634 = vmatpush1.msra.mxu0 0.0
        %1635 = vmatprep.subr.mxu0 0.0
        %1636 = vmatpush1.msra.mxu0 0.0
        %1637 = vmatprep.subr.mxu0 0.0
        %1638 = vmatpush1.msra.mxu0 0.0
        %1639 = vmatprep.subr.mxu0 0.0
        %1640 = vmatpush1.msra.mxu0 0.0
        %1641 = vmatprep.subr.mxu0 0.0
        %1642 = vmatpush1.msra.mxu0 0.0
        %1643 = vmatprep.subr.mxu0 0.0
        %1644 = vmatpush1.msra.mxu0 0.0
        %1645 = vmatprep.subr.mxu0 0.0
        %1646 = vmatpush1.msra.mxu0 0.0
        %1647 = vmatprep.subr.mxu0 0.0
        %1648 = vmatpush1.msra.mxu0 0.0
        %1649 = vmatprep.subr.mxu0 0.0
        %1650 = vmatpush1.msra.mxu0 0.0
        %1651 = vmatprep.subr.mxu0 0.0
        %1652 = vmatpush1.msra.mxu0 0.0
        %1653 = vmatprep.subr.mxu0 0.0
        %1654 = vmatpush1.msra.mxu0 %v1625
        %1655 = vmatprep.subr.mxu0 0.0
        %1656 = vmatpush1.msra.mxu0 %v1624
        %1657 = vmatprep.subr.mxu0 0.0
        %1658 = vmatpush1.msra.mxu0 %v1623
        %1659 = vmatprep.subr.mxu0 0.0
        %1660 = vmatpush1.msra.mxu0 %v1622
        %1661 = vmatprep.subr.mxu0 0.0
        %1662 = vmatpush2.msra.mxu0 0.0
        %1663 = vmatprep.subr.mxu0 0.0
        %1664 = vmatpush2.msra.mxu0 0.0
        %1665 = vmatprep.subr.mxu0 0.0
        %1666 = vmatpush2.msra.mxu0 0.0
        %1667 = vmatprep.subr.mxu0 0.0
        %1668 = vmatpush2.msra.mxu0 0.0
        %1669 = vmatprep.subr.mxu0 0.0
        %1670 = vmatpush2.msra.mxu0 0.0
        %1671 = vmatprep.subr.mxu0 0.0
        %1672 = vmatpush2.msra.mxu0 0.0
        %1673 = vmatprep.subr.mxu0 0.0
        %1674 = vmatpush2.msra.mxu0 0.0
        %1675 = vmatprep.subr.mxu0 0.0
        %1676 = vmatpush2.msra.mxu0 0.0
        %1677 = vmatprep.subr.mxu0 0.0
        %1678 = vmatpush2.msra.mxu0 0.0
        %1679 = vmatprep.subr.mxu0 0.0
        %1680 = vmatpush2.msra.mxu0 0.0
        %1681 = vmatprep.subr.mxu0 0.0
        %1682 = vmatpush2.msra.mxu0 0.0
        %1683 = vmatprep.subr.mxu0 0.0
        %1684 = vmatpush2.msra.mxu0 0.0
        %1685 = vmatprep.subr.mxu0 0.0
        %1686 = vmatpush2.msra.mxu0 0.0
        %1687 = vmatprep.subr.mxu0 0.0
        %1688 = vmatpush2.msra.mxu0 0.0
        %1689 = vmatprep.subr.mxu0 0.0
        %1690 = vmatpush2.msra.mxu0 0.0
        %1691 = vmatprep.subr.mxu0 0.0
        %1692 = vmatpush2.msra.mxu0 0.0
        %1693 = vmatprep.mubr.f32.mxu0 0.0
        %1694 = vmatmul.mubr.f32.gmra.mxu0 %v1627
        %v1695 = vpop.f32.mrf.mxu0
        %v1696 = vadd.f32 0.0, %v1695
        %v1697 = vpop.f32.mrf.mxu0
        %1698 = vdwg.mxu0
        %v1699 = vmul.f32 %v1696, 0.17677669
        %v1700 = vlaneseq
        %v1701 = vshrl.u32 %v1700, 7
        %v1702 = vsub.s32 3, %v1701
        %v1703 = vrot.slane %v1011, %v1702
        %v1704 = vmul.f32 %v976, %v1703
        %vm1705 = vcmask 261126
        %v1706 = vsel %vm1705, %v1704, 0.0
        %1707 = vadd.xlane.f32.xlu0 %v1706
        %v1708 = vpop.xlane.xlu0 %1707
        %v1709 = vmul.f32 %v1708, 0.17677669
        %v1711 = vrot.slane %v1699, 2
        %v1713 = vsel %vm1127, %v1709, %v1711
        %v1714 = vsel %vm1130, %v1713, -1e+30
        %vm1715 = vcmask 130054
        %v1716 = vsel %vm1715, %v1714, -inf
        %1717 = vmax.xlane.f32.xlu0 %v1716
        %v1718 = vpop.xlane.xlu0 %1717
        %v1719 = vsub.f32 %v1714, %v1718
        %v1720 = vmul.f32 %v1719, 1.442695
        %v1721 = vpow.pop %v1720
        %v1722 = vsel %vm1715, %v1721, 0.0
        %1723 = vadd.xlane.f32.xlu0 %v1722
        %v1724 = vpop.xlane.xlu0 %1723
        %v1725 = vrcp.pop %v1724
        %v1726 = vmul.f32 %v1721, %v1725
        %v1727 = vsel %vm1127, %v1726, 0.0
        %v1728 = vsel %vm1715, %v1727, 0.0
        %1729 = vadd.xlane.f32.xlu0 %v1728
        %v1730 = vpop.xlane.xlu0 %1729
        %v1731 = vsel %vm1127, 0.0, %v1726
        %s1732 = scalar_lea.vmem %s519, 48 [#allocation7]
        %v1733 = vld [vmem:[%s1732] sm:$0xff]
        %v1734 = vld [vmem:[%s1732 + $0x8] sm:$0xff]
        %v1735 = vlaneseq
        %v1736 = vshrl.u32 %v1735, 7
        %v1737 = vsub.s32 3, %v1736
        %v1738 = vrot.slane %v1027, %v1737
        %v1739 = vmul.f32 %v1730, %v1738
        %v1741 = vrot.slane %v1731, 6
        %v1743 = vrot.slane %v1739, 6
        %v1745 = vsel %vm975, %v1741, 0
        %1747 = vmatprep.subr.mxu0 0.0
        %1748 = vmatpush1.msra.mxu0 0.0
        %1749 = vmatprep.subr.mxu0 0.0
        %1750 = vmatpush1.msra.mxu0 0.0
        %1751 = vmatprep.subr.mxu0 0.0
        %1752 = vmatpush1.msra.mxu0 0.0
        %1753 = vmatprep.subr.mxu0 0.0
        %1754 = vmatpush1.msra.mxu0 0.0
        %1755 = vmatprep.subr.mxu0 0.0
        %1756 = vmatpush1.msra.mxu0 0.0
        %1757 = vmatprep.subr.mxu0 0.0
        %1758 = vmatpush1.msra.mxu0 0.0
        %1759 = vmatprep.subr.mxu0 0.0
        %1760 = vmatpush1.msra.mxu0 0.0
        %1761 = vmatprep.subr.mxu0 0.0
        %1762 = vmatpush1.msra.mxu0 0.0
        %1763 = vmatprep.subr.mxu0 0.0
        %1764 = vmatpush1.msra.mxu0 0.0
        %1765 = vmatprep.subr.mxu0 0.0
        %1766 = vmatpush1.msra.mxu0 0.0
        %1767 = vmatprep.subr.mxu0 0.0
        %1768 = vmatpush1.msra.mxu0 0.0
        %1769 = vmatprep.subr.mxu0 0.0
        %1770 = vmatpush1.msra.mxu0 0.0
        %1771 = vmatprep.subr.mxu0 0.0
        %1772 = vmatpush1.msra.mxu0 0.0
        %1773 = vmatprep.subr.mxu0 0.0
        %1774 = vmatpush1.msra.mxu0 0.0
        %1775 = vmatprep.subr.mxu0 0.0
        %1776 = vmatpush1.msra.mxu0 %v1734
        %1777 = vmatprep.subr.mxu0 0.0
        %1778 = vmatpush1.msra.mxu0 %v1733
        %1779 = vmatprep.subr.mxu0 0.0
        %1780 = vmatpush2.msra.mxu0 0.0
        %1781 = vmatprep.subr.mxu0 0.0
        %1782 = vmatpush2.msra.mxu0 0.0
        %1783 = vmatprep.subr.mxu0 0.0
        %1784 = vmatpush2.msra.mxu0 0.0
        %1785 = vmatprep.subr.mxu0 0.0
        %1786 = vmatpush2.msra.mxu0 0.0
        %1787 = vmatprep.subr.mxu0 0.0
        %1788 = vmatpush2.msra.mxu0 0.0
        %1789 = vmatprep.subr.mxu0 0.0
        %1790 = vmatpush2.msra.mxu0 0.0
        %1791 = vmatprep.subr.mxu0 0.0
        %1792 = vmatpush2.msra.mxu0 0.0
        %1793 = vmatprep.subr.mxu0 0.0
        %1794 = vmatpush2.msra.mxu0 0.0
        %1795 = vmatprep.subr.mxu0 0.0
        %1796 = vmatpush2.msra.mxu0 0.0
        %1797 = vmatprep.subr.mxu0 0.0
        %1798 = vmatpush2.msra.mxu0 0.0
        %1799 = vmatprep.subr.mxu0 0.0
        %1800 = vmatpush2.msra.mxu0 0.0
        %1801 = vmatprep.subr.mxu0 0.0
        %1802 = vmatpush2.msra.mxu0 0.0
        %1803 = vmatprep.subr.mxu0 0.0
        %1804 = vmatpush2.msra.mxu0 0.0
        %1805 = vmatprep.subr.mxu0 0.0
        %1806 = vmatpush2.msra.mxu0 0.0
        %1807 = vmatprep.subr.mxu0 0.0
        %1808 = vmatpush2.msra.mxu0 0.0
        %1809 = vmatprep.subr.mxu0 0.0
        %1810 = vmatpush2.msra.mxu0 0.0
        %1811 = vmatprep.mubr.f32.mxu0 0.0
        %1812 = vmatmul.mubr.f32.gmra.mxu0 %v1745
        %v1813 = vpop.f32.mrf.mxu0
        %v1814 = vadd.f32 %v1743, %v1813
        %v1815 = vpop.f32.mrf.mxu0
        %1816 = vdwg.mxu0
        %v1818 = vrot.slane %v1226, 1
        %1819 = vrot.lane.b32.xlu0 %v1818, 32
        %v1820 = vpop.permute.xlu0 %1819
        %1823 = vrot.lane.b32.xlu0 %v1422, 64
        %v1824 = vpop.permute.xlu0 %1823
        %v1826 = vrot.slane %v1422, 1
        %1827 = vrot.lane.b32.xlu0 %v1826, 96
        %v1828 = vpop.permute.xlu0 %1827
        %v1831 = vrot.slane %v1618, 1
        %1832 = vrot.lane.b32.xlu0 %v1831, 32
        %v1833 = vpop.permute.xlu0 %1832
        %1836 = vrot.lane.b32.xlu0 %v1814, 64
        %v1837 = vpop.permute.xlu0 %1836
        %v1839 = vrot.slane %v1814, 1
        %1840 = vrot.lane.b32.xlu0 %v1839, 96
        %v1841 = vpop.permute.xlu0 %1840
        %v1843 = vsel %vm1041, %v1226, %v1820
        %vm1844 = vcmask 523264
        %v1845 = vsel %vm1844, %v1843, %v1824
        %vm1846 = vcmask 785408
        %v1847 = vsel %vm1846, %v1845, %v1828
        %v1848 = vsel %vm1041, %v1618, %v1833
        %v1849 = vsel %vm1844, %v1848, %v1837
        %v1850 = vsel %vm1846, %v1849, %v1841
        %v1851 = vld [vmem:[#allocation9] sm:$0xff]
        %v1852 = vld [vmem:[#allocation9 + $0x8] sm:$0xff]
        %v1853 = vld [vmem:[#allocation9 + $0x10] sm:$0xff]
        %v1854 = vld [vmem:[#allocation9 + $0x18] sm:$0xff]
        %v1855 = vld [vmem:[#allocation9 + $0x20] sm:$0xff]
        %v1856 = vld [vmem:[#allocation9 + $0x28] sm:$0xff]
        %v1857 = vld [vmem:[#allocation9 + $0x30] sm:$0xff]
        %v1858 = vld [vmem:[#allocation9 + $0x38] sm:$0xff]
        %v1859 = vld [vmem:[#allocation9 + $0x40] sm:$0xff]
        %v1860 = vld [vmem:[#allocation9 + $0x48] sm:$0xff]
        %v1861 = vld [vmem:[#allocation9 + $0x50] sm:$0xff]
        %v1862 = vld [vmem:[#allocation9 + $0x58] sm:$0xff]
        %v1863 = vld [vmem:[#allocation9 + $0x60] sm:$0xff]
        %v1864 = vld [vmem:[#allocation9 + $0x68] sm:$0xff]
        %v1865 = vld [vmem:[#allocation9 + $0x70] sm:$0xff]
        %v1866 = vld [vmem:[#allocation9 + $0x78] sm:$0xff]
        %v1867 = vld [vmem:[#allocation9 + $0x80] sm:$0xff]
        %v1868 = vld [vmem:[#allocation9 + $0x88] sm:$0xff]
        %v1869 = vld [vmem:[#allocation9 + $0x90] sm:$0xff]
        %v1870 = vld [vmem:[#allocation9 + $0x98] sm:$0xff]
        %v1871 = vld [vmem:[#allocation9 + $0xa0] sm:$0xff]
        %v1872 = vld [vmem:[#allocation9 + $0xa8] sm:$0xff]
        %v1873 = vld [vmem:[#allocation9 + $0xb0] sm:$0xff]
        %v1874 = vld [vmem:[#allocation9 + $0xb8] sm:$0xff]
        %v1875 = vld [vmem:[#allocation9 + $0xc0] sm:$0xff]
        %v1876 = vld [vmem:[#allocation9 + $0xc8] sm:$0xff]
        %v1877 = vld [vmem:[#allocation9 + $0xd0] sm:$0xff]
        %v1878 = vld [vmem:[#allocation9 + $0xd8] sm:$0xff]
        %v1879 = vld [vmem:[#allocation9 + $0xe0] sm:$0xff]
        %v1880 = vld [vmem:[#allocation9 + $0xe8] sm:$0xff]
        %v1881 = vld [vmem:[#allocation9 + $0xf0] sm:$0xff]
        %v1882 = vld [vmem:[#allocation9 + $0xf8] sm:$0xff]
        %v1883 = vld [vmem:[%s13] sm:$0x1]
        %1884 = vmatprep.subr.mxu0 0.0
        %1885 = vmatpush1.msra.mxu0 %v1866
        %1886 = vmatprep.subr.mxu0 0.0
        %1887 = vmatpush1.msra.mxu0 %v1865
        %1888 = vmatprep.subr.mxu0 0.0
        %1889 = vmatpush1.msra.mxu0 %v1864
        %1890 = vmatprep.subr.mxu0 0.0
        %1891 = vmatpush1.msra.mxu0 %v1863
        %1892 = vmatprep.subr.mxu0 0.0
        %1893 = vmatpush1.msra.mxu0 %v1862
        %1894 = vmatprep.subr.mxu0 0.0
        %1895 = vmatpush1.msra.mxu0 %v1861
        %1896 = vmatprep.subr.mxu0 0.0
        %1897 = vmatpush1.msra.mxu0 %v1860
        %1898 = vmatprep.subr.mxu0 0.0
        %1899 = vmatpush1.msra.mxu0 %v1859
        %1900 = vmatprep.subr.mxu0 0.0
        %1901 = vmatpush1.msra.mxu0 %v1858
        %1902 = vmatprep.subr.mxu0 0.0
        %1903 = vmatpush1.msra.mxu0 %v1857
        %1904 = vmatprep.subr.mxu0 0.0
        %1905 = vmatpush1.msra.mxu0 %v1856
        %1906 = vmatprep.subr.mxu0 0.0
        %1907 = vmatpush1.msra.mxu0 %v1855
        %1908 = vmatprep.subr.mxu0 0.0
        %1909 = vmatpush1.msra.mxu0 %v1854
        %1910 = vmatprep.subr.mxu0 0.0
        %1911 = vmatpush1.msra.mxu0 %v1853
        %1912 = vmatprep.subr.mxu0 0.0
        %1913 = vmatpush1.msra.mxu0 %v1852
        %1914 = vmatprep.subr.mxu0 0.0
        %1915 = vmatpush1.msra.mxu0 %v1851
        %1916 = vmatprep.subr.mxu0 0.0
        %1917 = vmatpush2.msra.mxu0 %v1882
        %1918 = vmatprep.subr.mxu0 0.0
        %1919 = vmatpush2.msra.mxu0 %v1881
        %1920 = vmatprep.subr.mxu0 0.0
        %1921 = vmatpush2.msra.mxu0 %v1880
        %1922 = vmatprep.subr.mxu0 0.0
        %1923 = vmatpush2.msra.mxu0 %v1879
        %1924 = vmatprep.subr.mxu0 0.0
        %1925 = vmatpush2.msra.mxu0 %v1878
        %1926 = vmatprep.subr.mxu0 0.0
        %1927 = vmatpush2.msra.mxu0 %v1877
        %1928 = vmatprep.subr.mxu0 0.0
        %1929 = vmatpush2.msra.mxu0 %v1876
        %1930 = vmatprep.subr.mxu0 0.0
        %1931 = vmatpush2.msra.mxu0 %v1875
        %1932 = vmatprep.subr.mxu0 0.0
        %1933 = vmatpush2.msra.mxu0 %v1874
        %1934 = vmatprep.subr.mxu0 0.0
        %1935 = vmatpush2.msra.mxu0 %v1873
        %1936 = vmatprep.subr.mxu0 0.0
        %1937 = vmatpush2.msra.mxu0 %v1872
        %1938 = vmatprep.subr.mxu0 0.0
        %1939 = vmatpush2.msra.mxu0 %v1871
        %1940 = vmatprep.subr.mxu0 0.0
        %1941 = vmatpush2.msra.mxu0 %v1870
        %1942 = vmatprep.subr.mxu0 0.0
        %1943 = vmatpush2.msra.mxu0 %v1869
        %1944 = vmatprep.subr.mxu0 0.0
        %1945 = vmatpush2.msra.mxu0 %v1868
        %1946 = vmatprep.subr.mxu0 0.0
        %1947 = vmatpush2.msra.mxu0 %v1867
        %1948 = vmatprep.mubr.f32.mxu0 %v1850
        %1949 = vmatmul.mubr.f32.gmra.mxu0 %v1847
        %v1950 = vpop.f32.mrf.mxu0
        %v1951 = vadd.f32 %v1883, %v1950
        %v1952 = vpop.f32.mrf.mxu0
        %1953 = vdwg.mxu0
        %1954 = vst [vmem:[%s572] sm:$0x1] %v1951
        %s1955 = sand.u32 %s335, 1
        %s1956 = scalar_lea.sflag [#allocation6], %s1955
        %s1957 = sand.u32 %s335, 1
        %s1958 = scalar_lea.vmem [#allocation10], %s1957
        %s1959 = sand.u32 %s39, 1
        %s1960 = scalar_lea.sflag [#allocation12], %s1959
        %s1961 = sand.u32 %s361, 1
        %s1962 = smul.addr %s1961, 4
        %s1963 = scalar_lea.vmem [#allocation11], %s1962
        %s1964 = sand.u32 %s39, 1
        %s1965 = scalar_lea.sflag [#allocation12], %s1964
        %s1966 = sand.u32 %s387, 1
        %s1967 = smul.addr %s1966, 4
        %s1968 = scalar_lea.vmem [#allocation13], %s1967
        // Predicated region
        $region85: #{tpu_custom_call.1} parent=71 // pred_check
          %p1969 = pneg %p345
        $region86: #{tpu_custom_call.1} parent=71 // pred_check_branch
          %1971 = sbr.rel (%p1969) target = $region88
        $region87: #{tpu_custom_call.1} parent=71 // pred_region
          %s1973 = ssub.s32 16, 16
          %1974 = vsyncadd %s1956, %s1973
          %s1975 = smul.addr %s39, 16
          %s1976 = scalar_lea.hbm %s14, %s1975
          %s1978 = sshll.u32 %s1958, 4
          %s1979 = int_to_ptr.vmem [resolvable:$true] %s1978
          %1981 = dma.vmem_to_hbm [thread:$0]  %s1979, 16, %s1976, %s1956
        $region88: #{tpu_custom_call.1} parent=71 // pred_fallthru
          _
        // Predicated region
        $region89: #{tpu_custom_call.1} parent=71 // pred_check
          %p1982 = pneg %p371
        $region90: #{tpu_custom_call.1} parent=71 // pred_check_branch
          %1984 = sbr.rel (%p1982) target = $region92
        $region91: #{tpu_custom_call.1} parent=71 // pred_region
          %s1986 = ssub.s32 64, 64
          %1987 = vsyncadd %s1960, %s1986
          %s1988 = smul.addr %s39, 64
          %s1989 = scalar_lea.hbm %s15, %s1988
          %s1991 = sshll.u32 %s1963, 4
          %s1992 = int_to_ptr.vmem [resolvable:$true] %s1991
          %1994 = dma.vmem_to_hbm [thread:$0]  %s1992, 64, %s1989, %s1960
        $region92: #{tpu_custom_call.1} parent=71 // pred_fallthru
          _
        // Predicated region
        $region93: #{tpu_custom_call.1} parent=71 // pred_check
          %p1995 = pneg %p397
        $region94: #{tpu_custom_call.1} parent=71 // pred_check_branch
          %1997 = sbr.rel (%p1995) target = $region96
        $region95: #{tpu_custom_call.1} parent=71 // pred_region
          %s1999 = ssub.s32 64, 64
          %2000 = vsyncadd %s1965, %s1999
          %s2001 = smul.addr %s39, 64
          %s2002 = scalar_lea.hbm %s16, %s2001
          %s2004 = sshll.u32 %s1968, 4
          %s2005 = int_to_ptr.vmem [resolvable:$true] %s2004
          %2007 = dma.vmem_to_hbm [thread:$0]  %s2005, 64, %s2002, %s1965
        $region96: #{tpu_custom_call.1} parent=71 // pred_fallthru
          _
      $region72: #{tpu_custom_call.1} parent=5 // pred_fallthru
        _
      %p2008 = scmp.le.s32.totalorder 2, %s34
      // Predicated region
      $region97: #{tpu_custom_call.1} parent=5 // pred_check
        %p2009 = pneg %p2008
      $region98: #{tpu_custom_call.1} parent=5 // pred_check_branch
        %2011 = sbr.rel (%p2009) target = $region100
      $region99: #{tpu_custom_call.1} parent=5 // pred_region
        %s2012 = ssub.s32 %s34, 2
        // Predicated region
        $region101: #{tpu_custom_call.1} parent=99 // pred_check
          %p2013 = pneg %p351
        $region102: #{tpu_custom_call.1} parent=99 // pred_check_branch
          %2015 = sbr.rel (%p2013) target = $region104
        $region103: #{tpu_custom_call.1} parent=99 // pred_region
          %s2016 = sand.u32 %s336, 1
          %s2017 = scalar_lea.sflag [#allocation6], %s2016
          %s2018 = sand.u32 %s336, 1
          %s2019 = scalar_lea.vmem [#allocation10], %s2018
          %2020 = dma.done %s2017, 16
        $region104: #{tpu_custom_call.1} parent=99 // pred_fallthru
          _
        // Predicated region
        $region105: #{tpu_custom_call.1} parent=99 // pred_check
          %p2021 = pneg %p377
        $region106: #{tpu_custom_call.1} parent=99 // pred_check_branch
          %2023 = sbr.rel (%p2021) target = $region108
        $region107: #{tpu_custom_call.1} parent=99 // pred_region
          %s2024 = sand.u32 %s40, 1
          %s2025 = scalar_lea.sflag [#allocation12], %s2024
          %s2026 = sand.u32 %s362, 1
          %s2027 = smul.addr %s2026, 4
          %s2028 = scalar_lea.vmem [#allocation11], %s2027
          %2029 = dma.done %s2025, 64
        $region108: #{tpu_custom_call.1} parent=99 // pred_fallthru
          _
        // Predicated region
        $region109: #{tpu_custom_call.1} parent=99 // pred_check
          %p2030 = pneg %p403
        $region110: #{tpu_custom_call.1} parent=99 // pred_check_branch
          %2032 = sbr.rel (%p2030) target = $region112
        $region111: #{tpu_custom_call.1} parent=99 // pred_region
          %s2033 = sand.u32 %s40, 1
          %s2034 = scalar_lea.sflag [#allocation12], %s2033
          %s2035 = sand.u32 %s388, 1
          %s2036 = smul.addr %s2035, 4
          %s2037 = scalar_lea.vmem [#allocation13], %s2036
          %2038 = dma.done %s2034, 64
        $region112: #{tpu_custom_call.1} parent=99 // pred_fallthru
          _
      $region100: #{tpu_custom_call.1} parent=5 // pred_fallthru
        _
    $region6: #{tpu_custom_call.1} parent=1 // loop_footer
      %s38 = sadd.s32 1, %s34
    $region7: #{tpu_custom_call.1} parent=1 // loop_footer_branch
      %33 = sbr.rel target = $region3
    $region8: #{tpu_custom_call.1} parent=1 // loop_exit
      _
    %2039 = vsyncpa [#allocation5], 1
    %s2040 = scalar_lea.sflag [#allocation5], 1
    %2041 = vsyncpa %s2040, 1
    %2042 = vsyncpa [#allocation8], 1
    %s2043 = scalar_lea.sflag [#allocation8], 1
    %2044 = vsyncpa %s2043, 1
    %2045 = vsyncpa [#allocation6], 1
    %s2046 = scalar_lea.sflag [#allocation6], 1
    %2047 = vsyncpa %s2046, 1
    %2048 = vsyncpa [#allocation12], 1
    %s2049 = scalar_lea.sflag [#allocation12], 1
    %2050 = vsyncpa %s2049, 1

</llo_original>
